<compile_context>
chip_gen: v7x
topology: tpu7x:2x2x1
jax: 0.10.0
libtpu: 0.0.40
codegen_flags: <defaults>
</compile_context>

<pallas_src>
import jax
import jax.numpy as jnp
from jax.experimental import pallas as pl
from jax.experimental.pallas import tpu as pltpu


def lstm_deeper_kernel(x_ref,
                       wih0_ref, b0_ref, whh0_ref, whh1_ref, wih1_ref, b1_ref,
                       w1_ref, bb1_ref, w2_ref, bb2_ref, w3_ref, bb3_ref,
                       o_ref,
                       gx_sc):
    B = o_ref.shape[0]
    TB = x_ref.shape[0]
    T = TB // B
    H4 = wih0_ref.shape[1]          # 4 * hidden_dim
    H = H4 // 4

    # ---- Phase 1: all-timestep layer-0 input gates with one MXU matmul. ----
    gx_sc[...] = (jnp.dot(x_ref[...], wih0_ref[...],
                          preferred_element_type=jnp.float32)
                  + b0_ref[...])    # (T*B, 4H), bias b0 folded in

    whh0 = whh0_ref[...]            # (H, 4H)
    whh1 = whh1_ref[...]            # (H, 4H)
    wih1 = wih1_ref[...]            # (H, 4H)
    b1b = jnp.broadcast_to(b1_ref[...], (B, H4))   # hoist broadcast out of loop

    def sig(v):
        # sigmoid(v) == 0.5*tanh(0.5*v) + 0.5 exactly (up to rounding):
        # a single EUP tanh push, no exp + divide on the latency chain.
        return 0.5 * jnp.tanh(0.5 * v) + 0.5

    def cell(gates, c_prev):
        # One sigmoid-form tanh + one tanh over the full 4H-lane gate vreg
        # (EUP slot), then slice the i|f|g|o chunks (PyTorch gate order).
        s = sig(gates)
        th = jnp.tanh(gates)
        i = s[:, 0 * H:1 * H]
        f = s[:, 1 * H:2 * H]
        g = th[:, 2 * H:3 * H]
        o = s[:, 3 * H:4 * H]
        c_new = f * c_prev + i * g
        h_new = o * jnp.tanh(c_new)
        return h_new, c_new

    def cell_first(gates):
        # h_prev == c_prev == 0: no recurrent term upstream, no f*c_prev here.
        s = sig(gates)
        th = jnp.tanh(gates)
        i = s[:, 0 * H:1 * H]
        g = th[:, 2 * H:3 * H]
        o = s[:, 3 * H:4 * H]
        c_new = i * g
        h_new = o * jnp.tanh(c_new)
        return h_new, c_new

    # ---- Peeled timestep 0 (zero initial state: no recurrent matmuls). ----
    gates0 = gx_sc[0:B, :]
    h0, c0 = cell_first(gates0)
    gates1 = jnp.dot(h0, wih1, preferred_element_type=jnp.float32) + b1b
    h1, c1 = cell_first(gates1)

    if T == 1:
        h_last = h1
    else:
        # Pre-issue the recurrent terms for step 1.  From here on the carry is
        # (rec0, rec1, c0, c1): no packed/concatenated h at all, and the
        # layer-0 recurrence no longer falsely waits on layer-1's h1 (as the
        # old block-diagonal fused matmul forced it to).
        rec0 = jnp.dot(h0, whh0, preferred_element_type=jnp.float32)
        rec1 = jnp.dot(h1, whh1, preferred_element_type=jnp.float32)

        def step(t, carry):
            rec0, rec1, c0, c1 = carry
            row = pl.multiple_of(t * B, B)
            g0 = gx_sc[pl.ds(row, B), :] + rec0
            h0n, c0n = cell(g0, c0)
            # Next step's layer-0 recurrent term: issued as soon as h0n
            # exists, overlapping with the layer-1 matmul / EUP work below.
            rec0n = jnp.dot(h0n, whh0, preferred_element_type=jnp.float32)
            g1 = (jnp.dot(h0n, wih1, preferred_element_type=jnp.float32)
                  + b1b + rec1)
            h1n, c1n = cell(g1, c1)
            rec1n = jnp.dot(h1n, whh1, preferred_element_type=jnp.float32)
            return rec0n, rec1n, c0n, c1n

        # Full unroll in the short-T regime (LLO can software-pipeline the two
        # layers across timesteps); cap it for long sequences to bound
        # instruction footprint / vreg live ranges.
        trip = T - 2
        unroll = True if trip <= 32 else 8
        rec0, rec1, c0, c1 = jax.lax.fori_loop(
            1, T - 1, step, (rec0, rec1, c0, c1), unroll=unroll)

        # ---- Peeled last timestep: no dead rec matmuls / dead c updates. ----
        g0 = gx_sc[(T - 1) * B:T * B, :] + rec0
        h0n, _ = cell(g0, c0)
        g1 = (jnp.dot(h0n, wih1, preferred_element_type=jnp.float32)
              + b1b + rec1)
        h_last, _ = cell(g1, c1)

    # ---- Dense head on the last timestep's layer-1 output (single store). --
    y = jnp.maximum(jnp.dot(h_last, w1_ref[...],
                            preferred_element_type=jnp.float32) + bb1_ref[...],
                    0.0)
    y = jnp.maximum(jnp.dot(y, w2_ref[...],
                            preferred_element_type=jnp.float32) + bb2_ref[...],
                    0.0)
    o_ref[...] = (jnp.dot(y, w3_ref[...],
                          preferred_element_type=jnp.float32) + bb3_ref[...])


def lstm_deeper_forward(x, params):
    """x: (batch, series_length, num_features) float32."""
    B, T, F = x.shape
    (wih0, whh0, b0, wih1, whh1, b1, w1, bb1, w2, bb2, w3, bb3) = params
    H = whh0.shape[0]
    out_dim = w3.shape[1]

    # Gate width must stay a multiple of 128 so the i|f|g|o slab and the
    # carried rec0/rec1 vregs land on vreg boundaries (pad 4H up if H changes).
    assert (4 * H) % 128 == 0, "pad hidden_dim so 4*H is a multiple of 128"

    # torch's x.contiguous().view(T, B, -1) is a raw memory reinterpretation;
    # flattening further to (T*B, F) keeps the exact same memory order.
    x2d = jnp.reshape(x, (T * B, F))

    weight_args = (wih0, b0, whh0, whh1, wih1, b1, w1, bb1, w2, bb2, w3, bb3)

    # VMEM scaling guard: the x-gate precompute slab grows linearly with T*B
    # and would collide with v7x's 64 MiB VMEM long before v5e/v6e's 128 MiB.
    vmem_bytes = 4 * (int(x2d.size) + sum(int(w.size) for w in weight_args)
                      + T * B * 4 * H + B * out_dim)
    if vmem_bytes > 48 * 1024 * 1024:
        # TODO(synk): chunk the x-gate precompute over time (emit_pipeline over
        # T-chunks feeding the recurrence) before scaling T/B this far.
        raise NotImplementedError("x-gate slab too large for single-shot VMEM")
    compiler_params = None
    if vmem_bytes > 16 * 1024 * 1024:
        compiler_params = pltpu.CompilerParams(
            vmem_limit_bytes=min(2 * vmem_bytes, 60 * 1024 * 1024))

    def full_spec(arr):
        nd = arr.ndim
        return pl.BlockSpec(arr.shape, lambda: (0,) * nd)

    return pl.pallas_call(
        lstm_deeper_kernel,
        out_shape=jax.ShapeDtypeStruct((B, out_dim), jnp.float32),
        in_specs=[full_spec(x2d)] + [full_spec(w) for w in weight_args],
        out_specs=pl.BlockSpec((B, out_dim), lambda: (0, 0)),
        scratch_shapes=[pltpu.VMEM((T * B, 4 * H), jnp.float32)],
        compiler_params=compiler_params,
    )(x2d, *weight_args)


def make_params(key, num_features, hidden_dim, dense_hidden, dense_hidden_2,
                output_dim):
    """Parameter init; shapes match nn.LSTM(num_layers=2) + fc head.

    LSTM weights are stored transposed ((in, 4H)) so the kernel does x @ W.
    The two PyTorch biases b_ih + b_hh are pre-summed (mathematically identical).
    """
    ks = jax.random.split(key, 16)
    H = hidden_dim

    def u(k, shape, bound):
        return jax.random.uniform(k, shape, jnp.float32, -bound, bound)

    kl = 1.0 / jnp.sqrt(H)
    wih0 = u(ks[0], (num_features, 4 * H), kl)
    whh0 = u(ks[1], (H, 4 * H), kl)
    b0 = u(ks[2], (1, 4 * H), kl) + u(ks[3], (1, 4 * H), kl)   # b_ih + b_hh
    wih1 = u(ks[4], (H, 4 * H), kl)
    whh1 = u(ks[5], (H, 4 * H), kl)
    b1 = u(ks[6], (1, 4 * H), kl) + u(ks[7], (1, 4 * H), kl)

    k1 = 1.0 / jnp.sqrt(H)
    w1 = u(ks[8], (H, dense_hidden), k1)
    bb1 = u(ks[9], (1, dense_hidden), k1)
    k2 = 1.0 / jnp.sqrt(dense_hidden)
    w2 = u(ks[10], (dense_hidden, dense_hidden_2), k2)
    bb2 = u(ks[11], (1, dense_hidden_2), k2)
    k3 = 1.0 / jnp.sqrt(dense_hidden_2)
    w3 = u(ks[12], (dense_hidden_2, output_dim), k3)
    bb3 = u(ks[13], (1, output_dim), k3)

    return (wih0, whh0, b0, wih1, whh1, b1, w1, bb1, w2, bb2, w3, bb3)


def reference_forward(x, params):
    """Pure-JAX reference (same semantics as the PyTorch eval forward)."""
    (wih0, whh0, b0, wih1, whh1, b1, w1, bb1, w2, bb2, w3, bb3) = params
    B, T, F = x.shape
    H = whh0.shape[0]
    x_seq = jnp.reshape(x, (T, B, F))

    def cell(inp, h, c, wih, whh, b):
        g = inp @ wih + h @ whh + b
        i = jax.nn.sigmoid(g[:, 0 * H:1 * H])
        f = jax.nn.sigmoid(g[:, 1 * H:2 * H])
        gg = jnp.tanh(g[:, 2 * H:3 * H])
        o = jax.nn.sigmoid(g[:, 3 * H:4 * H])
        c = f * c + i * gg
        h = o * jnp.tanh(c)
        return h, c

    h0 = jnp.zeros((B, H), jnp.float32)
    c0 = jnp.zeros((B, H), jnp.float32)
    h1 = jnp.zeros((B, H), jnp.float32)
    c1 = jnp.zeros((B, H), jnp.float32)
    for t in range(T):
        h0, c0 = cell(x_seq[t], h0, c0, wih0, whh0, b0)
        h1, c1 = cell(h0, h1, c1, wih1, whh1, b1)
    y = jnp.maximum(h1 @ w1 + bb1, 0.0)
    y = jnp.maximum(y @ w2 + bb2, 0.0)
    return y @ w3 + bb3


if __name__ == "__main__":
    # small shapes consistent with the module
    batch_size = 8
    series_length = 8
    num_features = 16
    hidden_dim = 32
    dense_hidden = 32
    dense_hidden_2 = 16
    output_dim = 4

    key = jax.random.PRNGKey(0)
    kx, kp = jax.random.split(key)
    x = jax.random.normal(kx, (batch_size, series_length, num_features),
                          dtype=jnp.float32)
    params = make_params(kp, num_features, hidden_dim, dense_hidden,
                         dense_hidden_2, output_dim)

    out = lstm_deeper_forward(x, params)
    out = jax.block_until_ready(out)

    ref = reference_forward(x, params)
    assert out.shape == (batch_size, output_dim)
    # Loose-but-meaningful tolerance: precomputed x-gates / carried recurrent
    # terms and the tanh-form sigmoid reassociate f32 rounding vs the reference.
    assert jnp.allclose(out, ref, atol=1e-4, rtol=1e-4), "mismatch vs reference"

    print("KERNEL_OK")
</pallas_src>

<mosaic_0001>
module attributes {stable_mosaic.version = 11 : i64} {
  func.func @lstm_deeper_kernel(%arg0: memref<64x16xf32, #tpu.memory_space<vmem>>, %arg1: memref<16x128xf32, #tpu.memory_space<vmem>>, %arg2: memref<1x128xf32, #tpu.memory_space<vmem>>, %arg3: memref<32x128xf32, #tpu.memory_space<vmem>>, %arg4: memref<32x128xf32, #tpu.memory_space<vmem>>, %arg5: memref<32x128xf32, #tpu.memory_space<vmem>>, %arg6: memref<1x128xf32, #tpu.memory_space<vmem>>, %arg7: memref<32x32xf32, #tpu.memory_space<vmem>>, %arg8: memref<1x32xf32, #tpu.memory_space<vmem>>, %arg9: memref<32x16xf32, #tpu.memory_space<vmem>>, %arg10: memref<1x16xf32, #tpu.memory_space<vmem>>, %arg11: memref<16x4xf32, #tpu.memory_space<vmem>>, %arg12: memref<1x4xf32, #tpu.memory_space<vmem>>, %arg13: memref<8x4xf32, #tpu.memory_space<vmem>>, %arg14: memref<64x128xf32, #tpu.memory_space<vmem>>) attributes {dimension_semantics = [], scalar_prefetch = 0 : i64, scratch_operands = 1 : i64, tpu.core_type = #tpu.core_type<tc>} {
    %c0 = arith.constant 0 : index
    %c0_0 = arith.constant 0 : index
    %0 = vector.load %arg0[%c0, %c0_0] : memref<64x16xf32, #tpu.memory_space<vmem>>, vector<64x16xf32>
    %c0_1 = arith.constant 0 : index
    %c0_2 = arith.constant 0 : index
    %1 = vector.load %arg1[%c0_1, %c0_2] : memref<16x128xf32, #tpu.memory_space<vmem>>, vector<16x128xf32>
    %cst = arith.constant dense<0.000000e+00> : vector<64x128xf32>
    %2 = tpu.matmul %0, %1, %cst {dimension_numbers = #tpu.dot_dimension_numbers<[1], [0], [0], [1], [0, 0, 1, 1], [], []>} : vector<64x16xf32>, vector<16x128xf32>, vector<64x128xf32> -> vector<64x128xf32>
    %c0_3 = arith.constant 0 : index
    %c0_4 = arith.constant 0 : index
    %3 = vector.load %arg2[%c0_3, %c0_4] : memref<1x128xf32, #tpu.memory_space<vmem>>, vector<1x128xf32>
    %4 = vector.broadcast %3 : vector<1x128xf32> to vector<64x128xf32>
    %5 = arith.addf %2, %4 : vector<64x128xf32>
    %c0_5 = arith.constant 0 : index
    %c0_6 = arith.constant 0 : index
    %6 = vector.load %arg14[%c0_5, %c0_6] : memref<64x128xf32, #tpu.memory_space<vmem>>, vector<64x128xf32>
    tpu.vector_store %arg14[%c0_5, %c0_6], %5 {strides = array<i32>} : memref<64x128xf32, #tpu.memory_space<vmem>>, vector<64x128xf32>,
    %c0_7 = arith.constant 0 : index
    %c0_8 = arith.constant 0 : index
    %7 = vector.load %arg3[%c0_7, %c0_8] : memref<32x128xf32, #tpu.memory_space<vmem>>, vector<32x128xf32>
    %c0_9 = arith.constant 0 : index
    %c0_10 = arith.constant 0 : index
    %8 = vector.load %arg4[%c0_9, %c0_10] : memref<32x128xf32, #tpu.memory_space<vmem>>, vector<32x128xf32>
    %c0_11 = arith.constant 0 : index
    %c0_12 = arith.constant 0 : index
    %9 = vector.load %arg5[%c0_11, %c0_12] : memref<32x128xf32, #tpu.memory_space<vmem>>, vector<32x128xf32>
    %c0_13 = arith.constant 0 : index
    %c0_14 = arith.constant 0 : index
    %10 = vector.load %arg6[%c0_13, %c0_14] : memref<1x128xf32, #tpu.memory_space<vmem>>, vector<1x128xf32>
    %11 = vector.shape_cast %10 : vector<1x128xf32> to vector<1x128xf32>
    %12 = vector.broadcast %11 : vector<1x128xf32> to vector<8x128xf32>
    %c0_15 = arith.constant 0 : index
    %c0_16 = arith.constant 0 : index
    %13 = vector.load %arg14[%c0_15, %c0_16] : memref<64x128xf32, #tpu.memory_space<vmem>>, vector<8x128xf32>
    %cst_17 = arith.constant 5.000000e-01 : f32
    %14 = vector.broadcast %cst_17 : f32 to vector<8x128xf32>
    %15 = arith.mulf %14, %13 : vector<8x128xf32>
    %16 = math.tanh %15 : vector<8x128xf32>
    %cst_18 = arith.constant 5.000000e-01 : f32
    %17 = vector.broadcast %cst_18 : f32 to vector<8x128xf32>
    %18 = arith.mulf %17, %16 : vector<8x128xf32>
    %cst_19 = arith.constant 5.000000e-01 : f32
    %19 = vector.broadcast %cst_19 : f32 to vector<8x128xf32>
    %20 = arith.addf %18, %19 : vector<8x128xf32>
    %21 = math.tanh %13 : vector<8x128xf32>
    %22 = vector.extract_strided_slice %20 {offsets = [0, 0], sizes = [8, 32], strides = [1, 1]} : vector<8x128xf32> to vector<8x32xf32>
    %23 = vector.extract_strided_slice %21 {offsets = [0, 64], sizes = [8, 32], strides = [1, 1]} : vector<8x128xf32> to vector<8x32xf32>
    %24 = vector.extract_strided_slice %20 {offsets = [0, 96], sizes = [8, 32], strides = [1, 1]} : vector<8x128xf32> to vector<8x32xf32>
    %25 = arith.mulf %22, %23 : vector<8x32xf32>
    %26 = math.tanh %25 : vector<8x32xf32>
    %27 = arith.mulf %24, %26 : vector<8x32xf32>
    %cst_20 = arith.constant dense<0.000000e+00> : vector<8x128xf32>
    %28 = tpu.matmul %27, %9, %cst_20 {dimension_numbers = #tpu.dot_dimension_numbers<[1], [0], [0], [1], [0, 0, 1, 1], [], []>} : vector<8x32xf32>, vector<32x128xf32>, vector<8x128xf32> -> vector<8x128xf32>
    %29 = arith.addf %28, %12 : vector<8x128xf32>
    %cst_21 = arith.constant 5.000000e-01 : f32
    %30 = vector.broadcast %cst_21 : f32 to vector<8x128xf32>
    %31 = arith.mulf %30, %29 : vector<8x128xf32>
    %32 = math.tanh %31 : vector<8x128xf32>
    %cst_22 = arith.constant 5.000000e-01 : f32
    %33 = vector.broadcast %cst_22 : f32 to vector<8x128xf32>
    %34 = arith.mulf %33, %32 : vector<8x128xf32>
    %cst_23 = arith.constant 5.000000e-01 : f32
    %35 = vector.broadcast %cst_23 : f32 to vector<8x128xf32>
    %36 = arith.addf %34, %35 : vector<8x128xf32>
    %37 = math.tanh %29 : vector<8x128xf32>
    %38 = vector.extract_strided_slice %36 {offsets = [0, 0], sizes = [8, 32], strides = [1, 1]} : vector<8x128xf32> to vector<8x32xf32>
    %39 = vector.extract_strided_slice %37 {offsets = [0, 64], sizes = [8, 32], strides = [1, 1]} : vector<8x128xf32> to vector<8x32xf32>
    %40 = vector.extract_strided_slice %36 {offsets = [0, 96], sizes = [8, 32], strides = [1, 1]} : vector<8x128xf32> to vector<8x32xf32>
    %41 = arith.mulf %38, %39 : vector<8x32xf32>
    %42 = math.tanh %41 : vector<8x32xf32>
    %43 = arith.mulf %40, %42 : vector<8x32xf32>
    %cst_24 = arith.constant dense<0.000000e+00> : vector<8x128xf32>
    %44 = tpu.matmul %27, %7, %cst_24 {dimension_numbers = #tpu.dot_dimension_numbers<[1], [0], [0], [1], [0, 0, 1, 1], [], []>} : vector<8x32xf32>, vector<32x128xf32>, vector<8x128xf32> -> vector<8x128xf32>
    %cst_25 = arith.constant dense<0.000000e+00> : vector<8x128xf32>
    %45 = tpu.matmul %43, %8, %cst_25 {dimension_numbers = #tpu.dot_dimension_numbers<[1], [0], [0], [1], [0, 0, 1, 1], [], []>} : vector<8x32xf32>, vector<32x128xf32>, vector<8x128xf32> -> vector<8x128xf32>
    %c1_i32 = arith.constant 1 : i32
    %c8_i32 = arith.constant 8 : i32
    %46 = arith.muli %c1_i32, %c8_i32 : i32
    %47 = tpu.assume_multiple %46, 8 : i32
    %48 = arith.index_cast %47 : i32 to index
    %c0_26 = arith.constant 0 : index
    %49 = vector.load %arg14[%48, %c0_26] : memref<64x128xf32, #tpu.memory_space<vmem>>, vector<8x128xf32>
    %50 = arith.addf %49, %44 : vector<8x128xf32>
    %cst_27 = arith.constant 5.000000e-01 : f32
    %51 = vector.broadcast %cst_27 : f32 to vector<8x128xf32>
    %52 = arith.mulf %51, %50 : vector<8x128xf32>
    %53 = math.tanh %52 : vector<8x128xf32>
    %cst_28 = arith.constant 5.000000e-01 : f32
    %54 = vector.broadcast %cst_28 : f32 to vector<8x128xf32>
    %55 = arith.mulf %54, %53 : vector<8x128xf32>
    %cst_29 = arith.constant 5.000000e-01 : f32
    %56 = vector.broadcast %cst_29 : f32 to vector<8x128xf32>
    %57 = arith.addf %55, %56 : vector<8x128xf32>
    %58 = math.tanh %50 : vector<8x128xf32>
    %59 = vector.extract_strided_slice %57 {offsets = [0, 0], sizes = [8, 32], strides = [1, 1]} : vector<8x128xf32> to vector<8x32xf32>
    %60 = vector.extract_strided_slice %57 {offsets = [0, 32], sizes = [8, 32], strides = [1, 1]} : vector<8x128xf32> to vector<8x32xf32>
    %61 = vector.extract_strided_slice %58 {offsets = [0, 64], sizes = [8, 32], strides = [1, 1]} : vector<8x128xf32> to vector<8x32xf32>
    %62 = vector.extract_strided_slice %57 {offsets = [0, 96], sizes = [8, 32], strides = [1, 1]} : vector<8x128xf32> to vector<8x32xf32>
    %63 = arith.mulf %60, %25 : vector<8x32xf32>
    %64 = arith.mulf %59, %61 : vector<8x32xf32>
    %65 = arith.addf %63, %64 : vector<8x32xf32>
    %66 = math.tanh %65 : vector<8x32xf32>
    %67 = arith.mulf %62, %66 : vector<8x32xf32>
    %cst_30 = arith.constant dense<0.000000e+00> : vector<8x128xf32>
    %68 = tpu.matmul %67, %7, %cst_30 {dimension_numbers = #tpu.dot_dimension_numbers<[1], [0], [0], [1], [0, 0, 1, 1], [], []>} : vector<8x32xf32>, vector<32x128xf32>, vector<8x128xf32> -> vector<8x128xf32>
    %cst_31 = arith.constant dense<0.000000e+00> : vector<8x128xf32>
    %69 = tpu.matmul %67, %9, %cst_31 {dimension_numbers = #tpu.dot_dimension_numbers<[1], [0], [0], [1], [0, 0, 1, 1], [], []>} : vector<8x32xf32>, vector<32x128xf32>, vector<8x128xf32> -> vector<8x128xf32>
    %70 = arith.addf %69, %12 : vector<8x128xf32>
    %71 = arith.addf %70, %45 : vector<8x128xf32>
    %cst_32 = arith.constant 5.000000e-01 : f32
    %72 = vector.broadcast %cst_32 : f32 to vector<8x128xf32>
    %73 = arith.mulf %72, %71 : vector<8x128xf32>
    %74 = math.tanh %73 : vector<8x128xf32>
    %cst_33 = arith.constant 5.000000e-01 : f32
    %75 = vector.broadcast %cst_33 : f32 to vector<8x128xf32>
    %76 = arith.mulf %75, %74 : vector<8x128xf32>
    %cst_34 = arith.constant 5.000000e-01 : f32
    %77 = vector.broadcast %cst_34 : f32 to vector<8x128xf32>
    %78 = arith.addf %76, %77 : vector<8x128xf32>
    %79 = math.tanh %71 : vector<8x128xf32>
    %80 = vector.extract_strided_slice %78 {offsets = [0, 0], sizes = [8, 32], strides = [1, 1]} : vector<8x128xf32> to vector<8x32xf32>
    %81 = vector.extract_strided_slice %78 {offsets = [0, 32], sizes = [8, 32], strides = [1, 1]} : vector<8x128xf32> to vector<8x32xf32>
    %82 = vector.extract_strided_slice %79 {offsets = [0, 64], sizes = [8, 32], strides = [1, 1]} : vector<8x128xf32> to vector<8x32xf32>
    %83 = vector.extract_strided_slice %78 {offsets = [0, 96], sizes = [8, 32], strides = [1, 1]} : vector<8x128xf32> to vector<8x32xf32>
    %84 = arith.mulf %81, %41 : vector<8x32xf32>
    %85 = arith.mulf %80, %82 : vector<8x32xf32>
    %86 = arith.addf %84, %85 : vector<8x32xf32>
    %87 = math.tanh %86 : vector<8x32xf32>
    %88 = arith.mulf %83, %87 : vector<8x32xf32>
    %cst_35 = arith.constant dense<0.000000e+00> : vector<8x128xf32>
    %89 = tpu.matmul %88, %8, %cst_35 {dimension_numbers = #tpu.dot_dimension_numbers<[1], [0], [0], [1], [0, 0, 1, 1], [], []>} : vector<8x32xf32>, vector<32x128xf32>, vector<8x128xf32> -> vector<8x128xf32>
    %c2_i32 = arith.constant 2 : i32
    %c8_i32_36 = arith.constant 8 : i32
    %90 = arith.muli %c2_i32, %c8_i32_36 : i32
    %91 = tpu.assume_multiple %90, 8 : i32
    %92 = arith.index_cast %91 : i32 to index
    %c0_37 = arith.constant 0 : index
    %93 = vector.load %arg14[%92, %c0_37] : memref<64x128xf32, #tpu.memory_space<vmem>>, vector<8x128xf32>
    %94 = arith.addf %93, %68 : vector<8x128xf32>
    %cst_38 = arith.constant 5.000000e-01 : f32
    %95 = vector.broadcast %cst_38 : f32 to vector<8x128xf32>
    %96 = arith.mulf %95, %94 : vector<8x128xf32>
    %97 = math.tanh %96 : vector<8x128xf32>
    %cst_39 = arith.constant 5.000000e-01 : f32
    %98 = vector.broadcast %cst_39 : f32 to vector<8x128xf32>
    %99 = arith.mulf %98, %97 : vector<8x128xf32>
    %cst_40 = arith.constant 5.000000e-01 : f32
    %100 = vector.broadcast %cst_40 : f32 to vector<8x128xf32>
    %101 = arith.addf %99, %100 : vector<8x128xf32>
    %102 = math.tanh %94 : vector<8x128xf32>
    %103 = vector.extract_strided_slice %101 {offsets = [0, 0], sizes = [8, 32], strides = [1, 1]} : vector<8x128xf32> to vector<8x32xf32>
    %104 = vector.extract_strided_slice %101 {offsets = [0, 32], sizes = [8, 32], strides = [1, 1]} : vector<8x128xf32> to vector<8x32xf32>
    %105 = vector.extract_strided_slice %102 {offsets = [0, 64], sizes = [8, 32], strides = [1, 1]} : vector<8x128xf32> to vector<8x32xf32>
    %106 = vector.extract_strided_slice %101 {offsets = [0, 96], sizes = [8, 32], strides = [1, 1]} : vector<8x128xf32> to vector<8x32xf32>
    %107 = arith.mulf %104, %65 : vector<8x32xf32>
    %108 = arith.mulf %103, %105 : vector<8x32xf32>
    %109 = arith.addf %107, %108 : vector<8x32xf32>
    %110 = math.tanh %109 : vector<8x32xf32>
    %111 = arith.mulf %106, %110 : vector<8x32xf32>
    %cst_41 = arith.constant dense<0.000000e+00> : vector<8x128xf32>
    %112 = tpu.matmul %111, %7, %cst_41 {dimension_numbers = #tpu.dot_dimension_numbers<[1], [0], [0], [1], [0, 0, 1, 1], [], []>} : vector<8x32xf32>, vector<32x128xf32>, vector<8x128xf32> -> vector<8x128xf32>
    %cst_42 = arith.constant dense<0.000000e+00> : vector<8x128xf32>
    %113 = tpu.matmul %111, %9, %cst_42 {dimension_numbers = #tpu.dot_dimension_numbers<[1], [0], [0], [1], [0, 0, 1, 1], [], []>} : vector<8x32xf32>, vector<32x128xf32>, vector<8x128xf32> -> vector<8x128xf32>
    %114 = arith.addf %113, %12 : vector<8x128xf32>
    %115 = arith.addf %114, %89 : vector<8x128xf32>
    %cst_43 = arith.constant 5.000000e-01 : f32
    %116 = vector.broadcast %cst_43 : f32 to vector<8x128xf32>
    %117 = arith.mulf %116, %115 : vector<8x128xf32>
    %118 = math.tanh %117 : vector<8x128xf32>
    %cst_44 = arith.constant 5.000000e-01 : f32
    %119 = vector.broadcast %cst_44 : f32 to vector<8x128xf32>
    %120 = arith.mulf %119, %118 : vector<8x128xf32>
    %cst_45 = arith.constant 5.000000e-01 : f32
    %121 = vector.broadcast %cst_45 : f32 to vector<8x128xf32>
    %122 = arith.addf %120, %121 : vector<8x128xf32>
    %123 = math.tanh %115 : vector<8x128xf32>
    %124 = vector.extract_strided_slice %122 {offsets = [0, 0], sizes = [8, 32], strides = [1, 1]} : vector<8x128xf32> to vector<8x32xf32>
    %125 = vector.extract_strided_slice %122 {offsets = [0, 32], sizes = [8, 32], strides = [1, 1]} : vector<8x128xf32> to vector<8x32xf32>
    %126 = vector.extract_strided_slice %123 {offsets = [0, 64], sizes = [8, 32], strides = [1, 1]} : vector<8x128xf32> to vector<8x32xf32>
    %127 = vector.extract_strided_slice %122 {offsets = [0, 96], sizes = [8, 32], strides = [1, 1]} : vector<8x128xf32> to vector<8x32xf32>
    %128 = arith.mulf %125, %86 : vector<8x32xf32>
    %129 = arith.mulf %124, %126 : vector<8x32xf32>
    %130 = arith.addf %128, %129 : vector<8x32xf32>
    %131 = math.tanh %130 : vector<8x32xf32>
    %132 = arith.mulf %127, %131 : vector<8x32xf32>
    %cst_46 = arith.constant dense<0.000000e+00> : vector<8x128xf32>
    %133 = tpu.matmul %132, %8, %cst_46 {dimension_numbers = #tpu.dot_dimension_numbers<[1], [0], [0], [1], [0, 0, 1, 1], [], []>} : vector<8x32xf32>, vector<32x128xf32>, vector<8x128xf32> -> vector<8x128xf32>
    %c3_i32 = arith.constant 3 : i32
    %c8_i32_47 = arith.constant 8 : i32
    %134 = arith.muli %c3_i32, %c8_i32_47 : i32
    %135 = tpu.assume_multiple %134, 8 : i32
    %136 = arith.index_cast %135 : i32 to index
    %c0_48 = arith.constant 0 : index
    %137 = vector.load %arg14[%136, %c0_48] : memref<64x128xf32, #tpu.memory_space<vmem>>, vector<8x128xf32>
    %138 = arith.addf %137, %112 : vector<8x128xf32>
    %cst_49 = arith.constant 5.000000e-01 : f32
    %139 = vector.broadcast %cst_49 : f32 to vector<8x128xf32>
    %140 = arith.mulf %139, %138 : vector<8x128xf32>
    %141 = math.tanh %140 : vector<8x128xf32>
    %cst_50 = arith.constant 5.000000e-01 : f32
    %142 = vector.broadcast %cst_50 : f32 to vector<8x128xf32>
    %143 = arith.mulf %142, %141 : vector<8x128xf32>
    %cst_51 = arith.constant 5.000000e-01 : f32
    %144 = vector.broadcast %cst_51 : f32 to vector<8x128xf32>
    %145 = arith.addf %143, %144 : vector<8x128xf32>
    %146 = math.tanh %138 : vector<8x128xf32>
    %147 = vector.extract_strided_slice %145 {offsets = [0, 0], sizes = [8, 32], strides = [1, 1]} : vector<8x128xf32> to vector<8x32xf32>
    %148 = vector.extract_strided_slice %145 {offsets = [0, 32], sizes = [8, 32], strides = [1, 1]} : vector<8x128xf32> to vector<8x32xf32>
    %149 = vector.extract_strided_slice %146 {offsets = [0, 64], sizes = [8, 32], strides = [1, 1]} : vector<8x128xf32> to vector<8x32xf32>
    %150 = vector.extract_strided_slice %145 {offsets = [0, 96], sizes = [8, 32], strides = [1, 1]} : vector<8x128xf32> to vector<8x32xf32>
    %151 = arith.mulf %148, %109 : vector<8x32xf32>
    %152 = arith.mulf %147, %149 : vector<8x32xf32>
    %153 = arith.addf %151, %152 : vector<8x32xf32>
    %154 = math.tanh %153 : vector<8x32xf32>
    %155 = arith.mulf %150, %154 : vector<8x32xf32>
    %cst_52 = arith.constant dense<0.000000e+00> : vector<8x128xf32>
    %156 = tpu.matmul %155, %7, %cst_52 {dimension_numbers = #tpu.dot_dimension_numbers<[1], [0], [0], [1], [0, 0, 1, 1], [], []>} : vector<8x32xf32>, vector<32x128xf32>, vector<8x128xf32> -> vector<8x128xf32>
    %cst_53 = arith.constant dense<0.000000e+00> : vector<8x128xf32>
    %157 = tpu.matmul %155, %9, %cst_53 {dimension_numbers = #tpu.dot_dimension_numbers<[1], [0], [0], [1], [0, 0, 1, 1], [], []>} : vector<8x32xf32>, vector<32x128xf32>, vector<8x128xf32> -> vector<8x128xf32>
    %158 = arith.addf %157, %12 : vector<8x128xf32>
    %159 = arith.addf %158, %133 : vector<8x128xf32>
    %cst_54 = arith.constant 5.000000e-01 : f32
    %160 = vector.broadcast %cst_54 : f32 to vector<8x128xf32>
    %161 = arith.mulf %160, %159 : vector<8x128xf32>
    %162 = math.tanh %161 : vector<8x128xf32>
    %cst_55 = arith.constant 5.000000e-01 : f32
    %163 = vector.broadcast %cst_55 : f32 to vector<8x128xf32>
    %164 = arith.mulf %163, %162 : vector<8x128xf32>
    %cst_56 = arith.constant 5.000000e-01 : f32
    %165 = vector.broadcast %cst_56 : f32 to vector<8x128xf32>
    %166 = arith.addf %164, %165 : vector<8x128xf32>
    %167 = math.tanh %159 : vector<8x128xf32>
    %168 = vector.extract_strided_slice %166 {offsets = [0, 0], sizes = [8, 32], strides = [1, 1]} : vector<8x128xf32> to vector<8x32xf32>
    %169 = vector.extract_strided_slice %166 {offsets = [0, 32], sizes = [8, 32], strides = [1, 1]} : vector<8x128xf32> to vector<8x32xf32>
    %170 = vector.extract_strided_slice %167 {offsets = [0, 64], sizes = [8, 32], strides = [1, 1]} : vector<8x128xf32> to vector<8x32xf32>
    %171 = vector.extract_strided_slice %166 {offsets = [0, 96], sizes = [8, 32], strides = [1, 1]} : vector<8x128xf32> to vector<8x32xf32>
    %172 = arith.mulf %169, %130 : vector<8x32xf32>
    %173 = arith.mulf %168, %170 : vector<8x32xf32>
    %174 = arith.addf %172, %173 : vector<8x32xf32>
    %175 = math.tanh %174 : vector<8x32xf32>
    %176 = arith.mulf %171, %175 : vector<8x32xf32>
    %cst_57 = arith.constant dense<0.000000e+00> : vector<8x128xf32>
    %177 = tpu.matmul %176, %8, %cst_57 {dimension_numbers = #tpu.dot_dimension_numbers<[1], [0], [0], [1], [0, 0, 1, 1], [], []>} : vector<8x32xf32>, vector<32x128xf32>, vector<8x128xf32> -> vector<8x128xf32>
    %c4_i32 = arith.constant 4 : i32
    %c8_i32_58 = arith.constant 8 : i32
    %178 = arith.muli %c4_i32, %c8_i32_58 : i32
    %179 = tpu.assume_multiple %178, 8 : i32
    %180 = arith.index_cast %179 : i32 to index
    %c0_59 = arith.constant 0 : index
    %181 = vector.load %arg14[%180, %c0_59] : memref<64x128xf32, #tpu.memory_space<vmem>>, vector<8x128xf32>
    %182 = arith.addf %181, %156 : vector<8x128xf32>
    %cst_60 = arith.constant 5.000000e-01 : f32
    %183 = vector.broadcast %cst_60 : f32 to vector<8x128xf32>
    %184 = arith.mulf %183, %182 : vector<8x128xf32>
    %185 = math.tanh %184 : vector<8x128xf32>
    %cst_61 = arith.constant 5.000000e-01 : f32
    %186 = vector.broadcast %cst_61 : f32 to vector<8x128xf32>
    %187 = arith.mulf %186, %185 : vector<8x128xf32>
    %cst_62 = arith.constant 5.000000e-01 : f32
    %188 = vector.broadcast %cst_62 : f32 to vector<8x128xf32>
    %189 = arith.addf %187, %188 : vector<8x128xf32>
    %190 = math.tanh %182 : vector<8x128xf32>
    %191 = vector.extract_strided_slice %189 {offsets = [0, 0], sizes = [8, 32], strides = [1, 1]} : vector<8x128xf32> to vector<8x32xf32>
    %192 = vector.extract_strided_slice %189 {offsets = [0, 32], sizes = [8, 32], strides = [1, 1]} : vector<8x128xf32> to vector<8x32xf32>
    %193 = vector.extract_strided_slice %190 {offsets = [0, 64], sizes = [8, 32], strides = [1, 1]} : vector<8x128xf32> to vector<8x32xf32>
    %194 = vector.extract_strided_slice %189 {offsets = [0, 96], sizes = [8, 32], strides = [1, 1]} : vector<8x128xf32> to vector<8x32xf32>
    %195 = arith.mulf %192, %153 : vector<8x32xf32>
    %196 = arith.mulf %191, %193 : vector<8x32xf32>
    %197 = arith.addf %195, %196 : vector<8x32xf32>
    %198 = math.tanh %197 : vector<8x32xf32>
    %199 = arith.mulf %194, %198 : vector<8x32xf32>
    %cst_63 = arith.constant dense<0.000000e+00> : vector<8x128xf32>
    %200 = tpu.matmul %199, %7, %cst_63 {dimension_numbers = #tpu.dot_dimension_numbers<[1], [0], [0], [1], [0, 0, 1, 1], [], []>} : vector<8x32xf32>, vector<32x128xf32>, vector<8x128xf32> -> vector<8x128xf32>
    %cst_64 = arith.constant dense<0.000000e+00> : vector<8x128xf32>
    %201 = tpu.matmul %199, %9, %cst_64 {dimension_numbers = #tpu.dot_dimension_numbers<[1], [0], [0], [1], [0, 0, 1, 1], [], []>} : vector<8x32xf32>, vector<32x128xf32>, vector<8x128xf32> -> vector<8x128xf32>
    %202 = arith.addf %201, %12 : vector<8x128xf32>
    %203 = arith.addf %202, %177 : vector<8x128xf32>
    %cst_65 = arith.constant 5.000000e-01 : f32
    %204 = vector.broadcast %cst_65 : f32 to vector<8x128xf32>
    %205 = arith.mulf %204, %203 : vector<8x128xf32>
    %206 = math.tanh %205 : vector<8x128xf32>
    %cst_66 = arith.constant 5.000000e-01 : f32
    %207 = vector.broadcast %cst_66 : f32 to vector<8x128xf32>
    %208 = arith.mulf %207, %206 : vector<8x128xf32>
    %cst_67 = arith.constant 5.000000e-01 : f32
    %209 = vector.broadcast %cst_67 : f32 to vector<8x128xf32>
    %210 = arith.addf %208, %209 : vector<8x128xf32>
    %211 = math.tanh %203 : vector<8x128xf32>
    %212 = vector.extract_strided_slice %210 {offsets = [0, 0], sizes = [8, 32], strides = [1, 1]} : vector<8x128xf32> to vector<8x32xf32>
    %213 = vector.extract_strided_slice %210 {offsets = [0, 32], sizes = [8, 32], strides = [1, 1]} : vector<8x128xf32> to vector<8x32xf32>
    %214 = vector.extract_strided_slice %211 {offsets = [0, 64], sizes = [8, 32], strides = [1, 1]} : vector<8x128xf32> to vector<8x32xf32>
    %215 = vector.extract_strided_slice %210 {offsets = [0, 96], sizes = [8, 32], strides = [1, 1]} : vector<8x128xf32> to vector<8x32xf32>
    %216 = arith.mulf %213, %174 : vector<8x32xf32>
    %217 = arith.mulf %212, %214 : vector<8x32xf32>
    %218 = arith.addf %216, %217 : vector<8x32xf32>
    %219 = math.tanh %218 : vector<8x32xf32>
    %220 = arith.mulf %215, %219 : vector<8x32xf32>
    %cst_68 = arith.constant dense<0.000000e+00> : vector<8x128xf32>
    %221 = tpu.matmul %220, %8, %cst_68 {dimension_numbers = #tpu.dot_dimension_numbers<[1], [0], [0], [1], [0, 0, 1, 1], [], []>} : vector<8x32xf32>, vector<32x128xf32>, vector<8x128xf32> -> vector<8x128xf32>
    %c5_i32 = arith.constant 5 : i32
    %c8_i32_69 = arith.constant 8 : i32
    %222 = arith.muli %c5_i32, %c8_i32_69 : i32
    %223 = tpu.assume_multiple %222, 8 : i32
    %224 = arith.index_cast %223 : i32 to index
    %c0_70 = arith.constant 0 : index
    %225 = vector.load %arg14[%224, %c0_70] : memref<64x128xf32, #tpu.memory_space<vmem>>, vector<8x128xf32>
    %226 = arith.addf %225, %200 : vector<8x128xf32>
    %cst_71 = arith.constant 5.000000e-01 : f32
    %227 = vector.broadcast %cst_71 : f32 to vector<8x128xf32>
    %228 = arith.mulf %227, %226 : vector<8x128xf32>
    %229 = math.tanh %228 : vector<8x128xf32>
    %cst_72 = arith.constant 5.000000e-01 : f32
    %230 = vector.broadcast %cst_72 : f32 to vector<8x128xf32>
    %231 = arith.mulf %230, %229 : vector<8x128xf32>
    %cst_73 = arith.constant 5.000000e-01 : f32
    %232 = vector.broadcast %cst_73 : f32 to vector<8x128xf32>
    %233 = arith.addf %231, %232 : vector<8x128xf32>
    %234 = math.tanh %226 : vector<8x128xf32>
    %235 = vector.extract_strided_slice %233 {offsets = [0, 0], sizes = [8, 32], strides = [1, 1]} : vector<8x128xf32> to vector<8x32xf32>
    %236 = vector.extract_strided_slice %233 {offsets = [0, 32], sizes = [8, 32], strides = [1, 1]} : vector<8x128xf32> to vector<8x32xf32>
    %237 = vector.extract_strided_slice %234 {offsets = [0, 64], sizes = [8, 32], strides = [1, 1]} : vector<8x128xf32> to vector<8x32xf32>
    %238 = vector.extract_strided_slice %233 {offsets = [0, 96], sizes = [8, 32], strides = [1, 1]} : vector<8x128xf32> to vector<8x32xf32>
    %239 = arith.mulf %236, %197 : vector<8x32xf32>
    %240 = arith.mulf %235, %237 : vector<8x32xf32>
    %241 = arith.addf %239, %240 : vector<8x32xf32>
    %242 = math.tanh %241 : vector<8x32xf32>
    %243 = arith.mulf %238, %242 : vector<8x32xf32>
    %cst_74 = arith.constant dense<0.000000e+00> : vector<8x128xf32>
    %244 = tpu.matmul %243, %7, %cst_74 {dimension_numbers = #tpu.dot_dimension_numbers<[1], [0], [0], [1], [0, 0, 1, 1], [], []>} : vector<8x32xf32>, vector<32x128xf32>, vector<8x128xf32> -> vector<8x128xf32>
    %cst_75 = arith.constant dense<0.000000e+00> : vector<8x128xf32>
    %245 = tpu.matmul %243, %9, %cst_75 {dimension_numbers = #tpu.dot_dimension_numbers<[1], [0], [0], [1], [0, 0, 1, 1], [], []>} : vector<8x32xf32>, vector<32x128xf32>, vector<8x128xf32> -> vector<8x128xf32>
    %246 = arith.addf %245, %12 : vector<8x128xf32>
    %247 = arith.addf %246, %221 : vector<8x128xf32>
    %cst_76 = arith.constant 5.000000e-01 : f32
    %248 = vector.broadcast %cst_76 : f32 to vector<8x128xf32>
    %249 = arith.mulf %248, %247 : vector<8x128xf32>
    %250 = math.tanh %249 : vector<8x128xf32>
    %cst_77 = arith.constant 5.000000e-01 : f32
    %251 = vector.broadcast %cst_77 : f32 to vector<8x128xf32>
    %252 = arith.mulf %251, %250 : vector<8x128xf32>
    %cst_78 = arith.constant 5.000000e-01 : f32
    %253 = vector.broadcast %cst_78 : f32 to vector<8x128xf32>
    %254 = arith.addf %252, %253 : vector<8x128xf32>
    %255 = math.tanh %247 : vector<8x128xf32>
    %256 = vector.extract_strided_slice %254 {offsets = [0, 0], sizes = [8, 32], strides = [1, 1]} : vector<8x128xf32> to vector<8x32xf32>
    %257 = vector.extract_strided_slice %254 {offsets = [0, 32], sizes = [8, 32], strides = [1, 1]} : vector<8x128xf32> to vector<8x32xf32>
    %258 = vector.extract_strided_slice %255 {offsets = [0, 64], sizes = [8, 32], strides = [1, 1]} : vector<8x128xf32> to vector<8x32xf32>
    %259 = vector.extract_strided_slice %254 {offsets = [0, 96], sizes = [8, 32], strides = [1, 1]} : vector<8x128xf32> to vector<8x32xf32>
    %260 = arith.mulf %257, %218 : vector<8x32xf32>
    %261 = arith.mulf %256, %258 : vector<8x32xf32>
    %262 = arith.addf %260, %261 : vector<8x32xf32>
    %263 = math.tanh %262 : vector<8x32xf32>
    %264 = arith.mulf %259, %263 : vector<8x32xf32>
    %cst_79 = arith.constant dense<0.000000e+00> : vector<8x128xf32>
    %265 = tpu.matmul %264, %8, %cst_79 {dimension_numbers = #tpu.dot_dimension_numbers<[1], [0], [0], [1], [0, 0, 1, 1], [], []>} : vector<8x32xf32>, vector<32x128xf32>, vector<8x128xf32> -> vector<8x128xf32>
    %c6_i32 = arith.constant 6 : i32
    %c8_i32_80 = arith.constant 8 : i32
    %266 = arith.muli %c6_i32, %c8_i32_80 : i32
    %267 = tpu.assume_multiple %266, 8 : i32
    %268 = arith.index_cast %267 : i32 to index
    %c0_81 = arith.constant 0 : index
    %269 = vector.load %arg14[%268, %c0_81] : memref<64x128xf32, #tpu.memory_space<vmem>>, vector<8x128xf32>
    %270 = arith.addf %269, %244 : vector<8x128xf32>
    %cst_82 = arith.constant 5.000000e-01 : f32
    %271 = vector.broadcast %cst_82 : f32 to vector<8x128xf32>
    %272 = arith.mulf %271, %270 : vector<8x128xf32>
    %273 = math.tanh %272 : vector<8x128xf32>
    %cst_83 = arith.constant 5.000000e-01 : f32
    %274 = vector.broadcast %cst_83 : f32 to vector<8x128xf32>
    %275 = arith.mulf %274, %273 : vector<8x128xf32>
    %cst_84 = arith.constant 5.000000e-01 : f32
    %276 = vector.broadcast %cst_84 : f32 to vector<8x128xf32>
    %277 = arith.addf %275, %276 : vector<8x128xf32>
    %278 = math.tanh %270 : vector<8x128xf32>
    %279 = vector.extract_strided_slice %277 {offsets = [0, 0], sizes = [8, 32], strides = [1, 1]} : vector<8x128xf32> to vector<8x32xf32>
    %280 = vector.extract_strided_slice %277 {offsets = [0, 32], sizes = [8, 32], strides = [1, 1]} : vector<8x128xf32> to vector<8x32xf32>
    %281 = vector.extract_strided_slice %278 {offsets = [0, 64], sizes = [8, 32], strides = [1, 1]} : vector<8x128xf32> to vector<8x32xf32>
    %282 = vector.extract_strided_slice %277 {offsets = [0, 96], sizes = [8, 32], strides = [1, 1]} : vector<8x128xf32> to vector<8x32xf32>
    %283 = arith.mulf %280, %241 : vector<8x32xf32>
    %284 = arith.mulf %279, %281 : vector<8x32xf32>
    %285 = arith.addf %283, %284 : vector<8x32xf32>
    %286 = math.tanh %285 : vector<8x32xf32>
    %287 = arith.mulf %282, %286 : vector<8x32xf32>
    %cst_85 = arith.constant dense<0.000000e+00> : vector<8x128xf32>
    %288 = tpu.matmul %287, %7, %cst_85 {dimension_numbers = #tpu.dot_dimension_numbers<[1], [0], [0], [1], [0, 0, 1, 1], [], []>} : vector<8x32xf32>, vector<32x128xf32>, vector<8x128xf32> -> vector<8x128xf32>
    %cst_86 = arith.constant dense<0.000000e+00> : vector<8x128xf32>
    %289 = tpu.matmul %287, %9, %cst_86 {dimension_numbers = #tpu.dot_dimension_numbers<[1], [0], [0], [1], [0, 0, 1, 1], [], []>} : vector<8x32xf32>, vector<32x128xf32>, vector<8x128xf32> -> vector<8x128xf32>
    %290 = arith.addf %289, %12 : vector<8x128xf32>
    %291 = arith.addf %290, %265 : vector<8x128xf32>
    %cst_87 = arith.constant 5.000000e-01 : f32
    %292 = vector.broadcast %cst_87 : f32 to vector<8x128xf32>
    %293 = arith.mulf %292, %291 : vector<8x128xf32>
    %294 = math.tanh %293 : vector<8x128xf32>
    %cst_88 = arith.constant 5.000000e-01 : f32
    %295 = vector.broadcast %cst_88 : f32 to vector<8x128xf32>
    %296 = arith.mulf %295, %294 : vector<8x128xf32>
    %cst_89 = arith.constant 5.000000e-01 : f32
    %297 = vector.broadcast %cst_89 : f32 to vector<8x128xf32>
    %298 = arith.addf %296, %297 : vector<8x128xf32>
    %299 = math.tanh %291 : vector<8x128xf32>
    %300 = vector.extract_strided_slice %298 {offsets = [0, 0], sizes = [8, 32], strides = [1, 1]} : vector<8x128xf32> to vector<8x32xf32>
    %301 = vector.extract_strided_slice %298 {offsets = [0, 32], sizes = [8, 32], strides = [1, 1]} : vector<8x128xf32> to vector<8x32xf32>
    %302 = vector.extract_strided_slice %299 {offsets = [0, 64], sizes = [8, 32], strides = [1, 1]} : vector<8x128xf32> to vector<8x32xf32>
    %303 = vector.extract_strided_slice %298 {offsets = [0, 96], sizes = [8, 32], strides = [1, 1]} : vector<8x128xf32> to vector<8x32xf32>
    %304 = arith.mulf %301, %262 : vector<8x32xf32>
    %305 = arith.mulf %300, %302 : vector<8x32xf32>
    %306 = arith.addf %304, %305 : vector<8x32xf32>
    %307 = math.tanh %306 : vector<8x32xf32>
    %308 = arith.mulf %303, %307 : vector<8x32xf32>
    %cst_90 = arith.constant dense<0.000000e+00> : vector<8x128xf32>
    %309 = tpu.matmul %308, %8, %cst_90 {dimension_numbers = #tpu.dot_dimension_numbers<[1], [0], [0], [1], [0, 0, 1, 1], [], []>} : vector<8x32xf32>, vector<32x128xf32>, vector<8x128xf32> -> vector<8x128xf32>
    %c6_i32_91 = arith.constant 6 : i32
    %c56 = arith.constant 56 : index
    %c0_92 = arith.constant 0 : index
    %310 = vector.load %arg14[%c56, %c0_92] : memref<64x128xf32, #tpu.memory_space<vmem>>, vector<8x128xf32>
    %311 = arith.addf %310, %288 : vector<8x128xf32>
    %cst_93 = arith.constant 5.000000e-01 : f32
    %312 = vector.broadcast %cst_93 : f32 to vector<8x128xf32>
    %313 = arith.mulf %312, %311 : vector<8x128xf32>
    %314 = math.tanh %313 : vector<8x128xf32>
    %cst_94 = arith.constant 5.000000e-01 : f32
    %315 = vector.broadcast %cst_94 : f32 to vector<8x128xf32>
    %316 = arith.mulf %315, %314 : vector<8x128xf32>
    %cst_95 = arith.constant 5.000000e-01 : f32
    %317 = vector.broadcast %cst_95 : f32 to vector<8x128xf32>
    %318 = arith.addf %316, %317 : vector<8x128xf32>
    %319 = math.tanh %311 : vector<8x128xf32>
    %320 = vector.extract_strided_slice %318 {offsets = [0, 0], sizes = [8, 32], strides = [1, 1]} : vector<8x128xf32> to vector<8x32xf32>
    %321 = vector.extract_strided_slice %318 {offsets = [0, 32], sizes = [8, 32], strides = [1, 1]} : vector<8x128xf32> to vector<8x32xf32>
    %322 = vector.extract_strided_slice %319 {offsets = [0, 64], sizes = [8, 32], strides = [1, 1]} : vector<8x128xf32> to vector<8x32xf32>
    %323 = vector.extract_strided_slice %318 {offsets = [0, 96], sizes = [8, 32], strides = [1, 1]} : vector<8x128xf32> to vector<8x32xf32>
    %324 = arith.mulf %321, %285 : vector<8x32xf32>
    %325 = arith.mulf %320, %322 : vector<8x32xf32>
    %326 = arith.addf %324, %325 : vector<8x32xf32>
    %327 = math.tanh %326 : vector<8x32xf32>
    %328 = arith.mulf %323, %327 : vector<8x32xf32>
    %cst_96 = arith.constant dense<0.000000e+00> : vector<8x128xf32>
    %329 = tpu.matmul %328, %9, %cst_96 {dimension_numbers = #tpu.dot_dimension_numbers<[1], [0], [0], [1], [0, 0, 1, 1], [], []>} : vector<8x32xf32>, vector<32x128xf32>, vector<8x128xf32> -> vector<8x128xf32>
    %330 = arith.addf %329, %12 : vector<8x128xf32>
    %331 = arith.addf %330, %309 : vector<8x128xf32>
    %cst_97 = arith.constant 5.000000e-01 : f32
    %332 = vector.broadcast %cst_97 : f32 to vector<8x128xf32>
    %333 = arith.mulf %332, %331 : vector<8x128xf32>
    %334 = math.tanh %333 : vector<8x128xf32>
    %cst_98 = arith.constant 5.000000e-01 : f32
    %335 = vector.broadcast %cst_98 : f32 to vector<8x128xf32>
    %336 = arith.mulf %335, %334 : vector<8x128xf32>
    %cst_99 = arith.constant 5.000000e-01 : f32
    %337 = vector.broadcast %cst_99 : f32 to vector<8x128xf32>
    %338 = arith.addf %336, %337 : vector<8x128xf32>
    %339 = math.tanh %331 : vector<8x128xf32>
    %340 = vector.extract_strided_slice %338 {offsets = [0, 0], sizes = [8, 32], strides = [1, 1]} : vector<8x128xf32> to vector<8x32xf32>
    %341 = vector.extract_strided_slice %338 {offsets = [0, 32], sizes = [8, 32], strides = [1, 1]} : vector<8x128xf32> to vector<8x32xf32>
    %342 = vector.extract_strided_slice %339 {offsets = [0, 64], sizes = [8, 32], strides = [1, 1]} : vector<8x128xf32> to vector<8x32xf32>
    %343 = vector.extract_strided_slice %338 {offsets = [0, 96], sizes = [8, 32], strides = [1, 1]} : vector<8x128xf32> to vector<8x32xf32>
    %344 = arith.mulf %341, %306 : vector<8x32xf32>
    %345 = arith.mulf %340, %342 : vector<8x32xf32>
    %346 = arith.addf %344, %345 : vector<8x32xf32>
    %347 = math.tanh %346 : vector<8x32xf32>
    %348 = arith.mulf %343, %347 : vector<8x32xf32>
    %c0_100 = arith.constant 0 : index
    %c0_101 = arith.constant 0 : index
    %349 = vector.load %arg7[%c0_100, %c0_101] : memref<32x32xf32, #tpu.memory_space<vmem>>, vector<32x32xf32>
    %cst_102 = arith.constant dense<0.000000e+00> : vector<8x32xf32>
    %350 = tpu.matmul %348, %349, %cst_102 {dimension_numbers = #tpu.dot_dimension_numbers<[1], [0], [0], [1], [0, 0, 1, 1], [], []>} : vector<8x32xf32>, vector<32x32xf32>, vector<8x32xf32> -> vector<8x32xf32>
    %c0_103 = arith.constant 0 : index
    %c0_104 = arith.constant 0 : index
    %351 = vector.load %arg8[%c0_103, %c0_104] : memref<1x32xf32, #tpu.memory_space<vmem>>, vector<1x32xf32>
    %352 = vector.broadcast %351 : vector<1x32xf32> to vector<8x32xf32>
    %353 = arith.addf %350, %352 : vector<8x32xf32>
    %cst_105 = arith.constant 0.000000e+00 : f32
    %354 = vector.broadcast %cst_105 : f32 to vector<8x32xf32>
    %355 = arith.maximumf %353, %354 : vector<8x32xf32>
    %c0_106 = arith.constant 0 : index
    %c0_107 = arith.constant 0 : index
    %356 = vector.load %arg9[%c0_106, %c0_107] : memref<32x16xf32, #tpu.memory_space<vmem>>, vector<32x16xf32>
    %cst_108 = arith.constant dense<0.000000e+00> : vector<8x16xf32>
    %357 = tpu.matmul %355, %356, %cst_108 {dimension_numbers = #tpu.dot_dimension_numbers<[1], [0], [0], [1], [0, 0, 1, 1], [], []>} : vector<8x32xf32>, vector<32x16xf32>, vector<8x16xf32> -> vector<8x16xf32>
    %c0_109 = arith.constant 0 : index
    %c0_110 = arith.constant 0 : index
    %358 = vector.load %arg10[%c0_109, %c0_110] : memref<1x16xf32, #tpu.memory_space<vmem>>, vector<1x16xf32>
    %359 = vector.broadcast %358 : vector<1x16xf32> to vector<8x16xf32>
    %360 = arith.addf %357, %359 : vector<8x16xf32>
    %cst_111 = arith.constant 0.000000e+00 : f32
    %361 = vector.broadcast %cst_111 : f32 to vector<8x16xf32>
    %362 = arith.maximumf %360, %361 : vector<8x16xf32>
    %c0_112 = arith.constant 0 : index
    %c0_113 = arith.constant 0 : index
    %363 = vector.load %arg11[%c0_112, %c0_113] : memref<16x4xf32, #tpu.memory_space<vmem>>, vector<16x4xf32>
    %cst_114 = arith.constant dense<0.000000e+00> : vector<8x4xf32>
    %364 = tpu.matmul %362, %363, %cst_114 {dimension_numbers = #tpu.dot_dimension_numbers<[1], [0], [0], [1], [0, 0, 1, 1], [], []>} : vector<8x16xf32>, vector<16x4xf32>, vector<8x4xf32> -> vector<8x4xf32>
    %c0_115 = arith.constant 0 : index
    %c0_116 = arith.constant 0 : index
    %365 = vector.load %arg12[%c0_115, %c0_116] : memref<1x4xf32, #tpu.memory_space<vmem>>, vector<1x4xf32>
    %366 = vector.broadcast %365 : vector<1x4xf32> to vector<8x4xf32>
    %367 = arith.addf %364, %366 : vector<8x4xf32>
    %c0_117 = arith.constant 0 : index
    %c0_118 = arith.constant 0 : index
    %368 = vector.load %arg13[%c0_117, %c0_118] : memref<8x4xf32, #tpu.memory_space<vmem>>, vector<8x4xf32>
    tpu.vector_store %arg13[%c0_117, %c0_118], %367 {strides = array<i32>} : memref<8x4xf32, #tpu.memory_space<vmem>>, vector<8x4xf32>,
    return
  }
}

</mosaic_0001>

<llo_original>
// kernel: tpu_custom_call.1
$region0: #{tpu_custom_call.1}
  #allocation0 [shape = 'u32[]', space=smem, size = 0x4, offset = 0x4, fixed_abs, tag = 'smem constant byte address 0x4 - core index']
  #allocation1 [shape = 'u32[144,128]{1,0:T(1,128)}', space=vmem, size = 0x12000, scoped, tag = 'internal scratch']
  #allocation2 [shape = 'f32[64,128]{1,0:T(8,128)}', space=vmem, size = 0x8000, scoped, tag = 'scratch operand']
  %s0 = inlined_call_operand.vmem [shape: f32[64,16], index: 0, kind: input, shape index: {}]
  %s1 = inlined_call_operand.hbm [shape: f32[16,128], index: 1, kind: input, shape index: {}]
  %s2 = inlined_call_operand.vmem [shape: f32[1,128], index: 2, kind: input, shape index: {}]
  %s3 = inlined_call_operand.vmem [shape: f32[32,128], index: 3, kind: input, shape index: {}]
  %s4 = inlined_call_operand.vmem [shape: f32[32,128], index: 4, kind: input, shape index: {}]
  %s5 = inlined_call_operand.vmem [shape: f32[32,128], index: 5, kind: input, shape index: {}]
  %s6 = inlined_call_operand.vmem [shape: f32[1,128], index: 6, kind: input, shape index: {}]
  %s7 = inlined_call_operand.vmem [shape: f32[32,32], index: 7, kind: input, shape index: {}]
  %s8 = inlined_call_operand.vmem [shape: f32[1,32], index: 8, kind: input, shape index: {}]
  %s9 = inlined_call_operand.vmem [shape: f32[32,16], index: 9, kind: input, shape index: {}]
  %s10 = inlined_call_operand.vmem [shape: f32[1,16], index: 10, kind: input, shape index: {}]
  %s11 = inlined_call_operand.vmem [shape: f32[16,4], index: 11, kind: input, shape index: {}]
  %s12 = inlined_call_operand.vmem [shape: f32[1,4], index: 12, kind: input, shape index: {}]
  %s13 = inlined_call_operand.vmem [shape: f32[8,4], index: 13, kind: output, shape index: {}]
  %s14 = sld [smem:[#allocation0]]
  $region66: #{tpu_custom_call.1} parent=0
    _
  %s16 = ssub.s32 1, %s14
  %s17 = scalar_select 0, %s16, %s14
  $region1: #{tpu_custom_call.1} parent=0
    #allocation3 [shape = 'u8[8192]{0}', space=vmem, size = 0x2000, scoped, tag = 'input window, operand 1, single buffered']
    #allocation4 [shape = 's32[1]{0}', space=sflag, size = 0x4, scoped, tag = 'scoped memory for tpu_custom_call.1']
    %18 = vsyncpa [#allocation4], 0
    // Predicated region
    $region2: #{tpu_custom_call.1} parent=1 // pred_check
      _
    $region3: #{tpu_custom_call.1} parent=1 // pred_check_branch
      %20 = sbr.rel (0) target = $region5
    $region4: #{tpu_custom_call.1} parent=1 // pred_region
      _
    $region5: #{tpu_custom_call.1} parent=1 // pred_fallthru
      _
    // Predicated region
    $region6: #{tpu_custom_call.1} parent=1 // pred_check
      _
    $region7: #{tpu_custom_call.1} parent=1 // pred_check_branch
      %22 = sbr.rel (0) target = $region9
    $region8: #{tpu_custom_call.1} parent=1 // pred_region
      %s24 = ssub.s32 256, 256
      %25 = vsyncadd [#allocation4], %s24
      %s26 = sshll.u32 [#allocation3], 4
      %s27 = int_to_ptr.vmem [resolvable:$true] %s26
      %32 = dma.hbm_to_vmem [thread:$0]  %s1, 256, %s27, [#allocation4], 128, 128, 8
    $region9: #{tpu_custom_call.1} parent=1 // pred_fallthru
      _
    // Predicated region
    $region10: #{tpu_custom_call.1} parent=1 // pred_check
      _
    $region11: #{tpu_custom_call.1} parent=1 // pred_check_branch
      %34 = sbr.rel (0) target = $region13
    $region12: #{tpu_custom_call.1} parent=1 // pred_region
      _
    $region13: #{tpu_custom_call.1} parent=1 // pred_fallthru
      _
    // Predicated region
    $region14: #{tpu_custom_call.1} parent=1 // pred_check
      _
    $region15: #{tpu_custom_call.1} parent=1 // pred_check_branch
      %36 = sbr.rel (0) target = $region17
    $region16: #{tpu_custom_call.1} parent=1 // pred_region
      _
    $region17: #{tpu_custom_call.1} parent=1 // pred_fallthru
      _
    // Predicated region
    $region18: #{tpu_custom_call.1} parent=1 // pred_check
      _
    $region19: #{tpu_custom_call.1} parent=1 // pred_check_branch
      %38 = sbr.rel (0) target = $region21
    $region20: #{tpu_custom_call.1} parent=1 // pred_region
      _
    $region21: #{tpu_custom_call.1} parent=1 // pred_fallthru
      _
    // Predicated region
    $region22: #{tpu_custom_call.1} parent=1 // pred_check
      _
    $region23: #{tpu_custom_call.1} parent=1 // pred_check_branch
      %40 = sbr.rel (0) target = $region25
    $region24: #{tpu_custom_call.1} parent=1 // pred_region
      _
    $region25: #{tpu_custom_call.1} parent=1 // pred_fallthru
      _
    // Predicated region
    $region26: #{tpu_custom_call.1} parent=1 // pred_check
      _
    $region27: #{tpu_custom_call.1} parent=1 // pred_check_branch
      %42 = sbr.rel (0) target = $region29
    $region28: #{tpu_custom_call.1} parent=1 // pred_region
      _
    $region29: #{tpu_custom_call.1} parent=1 // pred_fallthru
      _
    // Predicated region
    $region30: #{tpu_custom_call.1} parent=1 // pred_check
      _
    $region31: #{tpu_custom_call.1} parent=1 // pred_check_branch
      %44 = sbr.rel (0) target = $region33
    $region32: #{tpu_custom_call.1} parent=1 // pred_region
      _
    $region33: #{tpu_custom_call.1} parent=1 // pred_fallthru
      _
    // Predicated region
    $region34: #{tpu_custom_call.1} parent=1 // pred_check
      _
    $region35: #{tpu_custom_call.1} parent=1 // pred_check_branch
      %46 = sbr.rel (0) target = $region37
    $region36: #{tpu_custom_call.1} parent=1 // pred_region
      _
    $region37: #{tpu_custom_call.1} parent=1 // pred_fallthru
      _
    // Predicated region
    $region38: #{tpu_custom_call.1} parent=1 // pred_check
      _
    $region39: #{tpu_custom_call.1} parent=1 // pred_check_branch
      %48 = sbr.rel (0) target = $region41
    $region40: #{tpu_custom_call.1} parent=1 // pred_region
      _
    $region41: #{tpu_custom_call.1} parent=1 // pred_fallthru
      _
    // Predicated region
    $region42: #{tpu_custom_call.1} parent=1 // pred_check
      _
    $region43: #{tpu_custom_call.1} parent=1 // pred_check_branch
      %50 = sbr.rel (0) target = $region45
    $region44: #{tpu_custom_call.1} parent=1 // pred_region
      _
    $region45: #{tpu_custom_call.1} parent=1 // pred_fallthru
      _
    // Predicated region
    $region46: #{tpu_custom_call.1} parent=1 // pred_check
      _
    $region47: #{tpu_custom_call.1} parent=1 // pred_check_branch
      %52 = sbr.rel (0) target = $region49
    $region48: #{tpu_custom_call.1} parent=1 // pred_region
      _
    $region49: #{tpu_custom_call.1} parent=1 // pred_fallthru
      _
    // Predicated region
    $region50: #{tpu_custom_call.1} parent=1 // pred_check
      _
    $region51: #{tpu_custom_call.1} parent=1 // pred_check_branch
      %54 = sbr.rel (0) target = $region53
    $region52: #{tpu_custom_call.1} parent=1 // pred_region
      _
    $region53: #{tpu_custom_call.1} parent=1 // pred_fallthru
      _
    // Predicated region
    $region54: #{tpu_custom_call.1} parent=1 // pred_check
      _
    $region55: #{tpu_custom_call.1} parent=1 // pred_check_branch
      %56 = sbr.rel (0) target = $region57
    $region56: #{tpu_custom_call.1} parent=1 // pred_region
      %57 = dma.done [#allocation4], 256
    $region57: #{tpu_custom_call.1} parent=1 // pred_fallthru
      _
    %v58 = vld [vmem:[%s0] sm:$0xff]
    %v59 = vld [vmem:[%s0 + $0x8] sm:$0xff]
    %v60 = vld [vmem:[%s0 + $0x10] sm:$0xff]
    %v61 = vld [vmem:[%s0 + $0x18] sm:$0xff]
    %v62 = vld [vmem:[%s0 + $0x20] sm:$0xff]
    %v63 = vld [vmem:[%s0 + $0x28] sm:$0xff]
    %v64 = vld [vmem:[%s0 + $0x30] sm:$0xff]
    %v65 = vld [vmem:[%s0 + $0x38] sm:$0xff]
    %v66 = vld [vmem:[#allocation3] sm:$0xff]
    %v67 = vld [vmem:[#allocation3 + $0x8] sm:$0xff]
    %v68 = vld [vmem:[%s2] sm:$0x1]
    %v70 = vlaneseq
    %v71 = vshrl.u32 %v70, 7
    %v72 = vsub.s32 0, %v71
    %v73 = vrot.slane %v68, %v72
    %vm75 = vcmask 130048
    %v77 = vsel %vm75, %v58, 0
    %v80 = vsel %vm75, %v59, 0
    %v83 = vsel %vm75, %v60, 0
    %v86 = vsel %vm75, %v61, 0
    %v89 = vsel %vm75, %v62, 0
    %v92 = vsel %vm75, %v63, 0
    %v95 = vsel %vm75, %v64, 0
    %v98 = vsel %vm75, %v65, 0
    %100 = vmatprep.subr.mxu0 0.0
    %101 = vmatpush1.msra.mxu0 %v66
    %102 = vmatprep.subr.mxu0 0.0
    %103 = vmatpush1.msra.mxu0 %v67
    %104 = vmatprep.subr.mxu0 0.0
    %105 = vmatpush1.msra.mxu0 0.0
    %106 = vmatprep.subr.mxu0 0.0
    %107 = vmatpush1.msra.mxu0 0.0
    %108 = vmatprep.subr.mxu0 0.0
    %109 = vmatpush1.msra.mxu0 0.0
    %110 = vmatprep.subr.mxu0 0.0
    %111 = vmatpush1.msra.mxu0 0.0
    %112 = vmatprep.subr.mxu0 0.0
    %113 = vmatpush1.msra.mxu0 0.0
    %114 = vmatprep.subr.mxu0 0.0
    %115 = vmatpush1.msra.mxu0 0.0
    %116 = vmatprep.subr.mxu0 0.0
    %117 = vmatpush1.msra.mxu0 0.0
    %118 = vmatprep.subr.mxu0 0.0
    %119 = vmatpush1.msra.mxu0 0.0
    %120 = vmatprep.subr.mxu0 0.0
    %121 = vmatpush1.msra.mxu0 0.0
    %122 = vmatprep.subr.mxu0 0.0
    %123 = vmatpush1.msra.mxu0 0.0
    %124 = vmatprep.subr.mxu0 0.0
    %125 = vmatpush1.msra.mxu0 0.0
    %126 = vmatprep.subr.mxu0 0.0
    %127 = vmatpush1.msra.mxu0 0.0
    %128 = vmatprep.subr.mxu0 0.0
    %129 = vmatpush1.msra.mxu0 0.0
    %130 = vmatprep.subr.mxu0 0.0
    %131 = vmatpush1.msra.mxu0 0.0
    %132 = vmatprep.subr.mxu0 0.0
    %133 = vmatpush1.msra.mxu0 0.0
    %134 = vmatprep.subr.mxu0 0.0
    %135 = vmatpush1.msra.mxu0 0.0
    %136 = vmatprep.subr.mxu0 0.0
    %137 = vmatpush1.msra.mxu0 0.0
    %138 = vmatprep.subr.mxu0 0.0
    %139 = vmatpush1.msra.mxu0 0.0
    %140 = vmatprep.subr.mxu0 0.0
    %141 = vmatpush1.msra.mxu0 0.0
    %142 = vmatprep.subr.mxu0 0.0
    %143 = vmatpush1.msra.mxu0 0.0
    %144 = vmatprep.subr.mxu0 0.0
    %145 = vmatpush1.msra.mxu0 0.0
    %146 = vmatprep.subr.mxu0 0.0
    %147 = vmatpush1.msra.mxu0 0.0
    %148 = vmatprep.subr.mxu0 0.0
    %149 = vmatpush1.msra.mxu0 0.0
    %150 = vmatprep.subr.mxu0 0.0
    %151 = vmatpush1.msra.mxu0 0.0
    %152 = vmatprep.subr.mxu0 0.0
    %153 = vmatpush1.msra.mxu0 0.0
    %154 = vmatprep.subr.mxu0 0.0
    %155 = vmatpush1.msra.mxu0 0.0
    %156 = vmatprep.subr.mxu0 0.0
    %157 = vmatpush1.msra.mxu0 0.0
    %158 = vmatprep.subr.mxu0 0.0
    %159 = vmatpush1.msra.mxu0 0.0
    %160 = vmatprep.subr.mxu0 0.0
    %161 = vmatpush1.msra.mxu0 0.0
    %162 = vmatprep.subr.mxu0 0.0
    %163 = vmatpush1.msra.mxu0 0.0
    %164 = vmatprep.mubr.f32.mxu0 0.0
    %165 = vmatmul.mubr.f32.gmra.mrb[0].mxu0 %v77
    %v166 = vpop.f32.mrb[0].mxu0
    %v167 = vadd.f32 %v73, %v166
    %v168 = vpop.f32.mrb[0].mxu0
    %169 = vmatprep.mubr.f32.mxu0 0.0
    %170 = vmatmul.mubr.f32.gmra.mrb[0].mxu0 %v80
    %v171 = vpop.f32.mrb[0].mxu0
    %v172 = vadd.f32 %v73, %v171
    %v173 = vpop.f32.mrb[0].mxu0
    %174 = vmatprep.mubr.f32.mxu0 0.0
    %175 = vmatmul.mubr.f32.gmra.mrb[0].mxu0 %v83
    %v176 = vpop.f32.mrb[0].mxu0
    %v177 = vadd.f32 %v73, %v176
    %v178 = vpop.f32.mrb[0].mxu0
    %179 = vmatprep.mubr.f32.mxu0 0.0
    %180 = vmatmul.mubr.f32.gmra.mrb[0].mxu0 %v86
    %v181 = vpop.f32.mrb[0].mxu0
    %v182 = vadd.f32 %v73, %v181
    %v183 = vpop.f32.mrb[0].mxu0
    %184 = vmatprep.mubr.f32.mxu0 0.0
    %185 = vmatmul.mubr.f32.gmra.mrb[0].mxu0 %v89
    %v186 = vpop.f32.mrb[0].mxu0
    %v187 = vadd.f32 %v73, %v186
    %v188 = vpop.f32.mrb[0].mxu0
    %189 = vmatprep.mubr.f32.mxu0 0.0
    %190 = vmatmul.mubr.f32.gmra.mrb[0].mxu0 %v92
    %v191 = vpop.f32.mrb[0].mxu0
    %v192 = vadd.f32 %v73, %v191
    %v193 = vpop.f32.mrb[0].mxu0
    %194 = vmatprep.mubr.f32.mxu0 0.0
    %195 = vmatmul.mubr.f32.gmra.mrb[0].mxu0 %v95
    %v196 = vpop.f32.mrb[0].mxu0
    %v197 = vadd.f32 %v73, %v196
    %v198 = vpop.f32.mrb[0].mxu0
    %199 = vmatprep.mubr.f32.mxu0 0.0
    %200 = vmatmul.mubr.f32.gmra.mrb[0].mxu0 %v98
    %v201 = vpop.f32.mrb[0].mxu0
    %v202 = vadd.f32 %v73, %v201
    %v203 = vpop.f32.mrb[0].mxu0
    %204 = vdwg.mxu0
    %205 = vst [vmem:[#allocation2] sm:$0xff] %v167
    %206 = vst [vmem:[#allocation2 + $0x8] sm:$0xff] %v172
    %207 = vst [vmem:[#allocation2 + $0x10] sm:$0xff] %v177
    %208 = vst [vmem:[#allocation2 + $0x18] sm:$0xff] %v182
    %209 = vst [vmem:[#allocation2 + $0x20] sm:$0xff] %v187
    %210 = vst [vmem:[#allocation2 + $0x28] sm:$0xff] %v192
    %211 = vst [vmem:[#allocation2 + $0x30] sm:$0xff] %v197
    %212 = vst [vmem:[#allocation2 + $0x38] sm:$0xff] %v202
    %v213 = vld [vmem:[%s3] sm:$0xff]
    %v214 = vld [vmem:[%s3 + $0x8] sm:$0xff]
    %v215 = vld [vmem:[%s3 + $0x10] sm:$0xff]
    %v216 = vld [vmem:[%s3 + $0x18] sm:$0xff]
    %v217 = vld [vmem:[%s4] sm:$0xff]
    %v218 = vld [vmem:[%s4 + $0x8] sm:$0xff]
    %v219 = vld [vmem:[%s4 + $0x10] sm:$0xff]
    %v220 = vld [vmem:[%s4 + $0x18] sm:$0xff]
    %v221 = vld [vmem:[%s5] sm:$0xff]
    %v222 = vld [vmem:[%s5 + $0x8] sm:$0xff]
    %v223 = vld [vmem:[%s5 + $0x10] sm:$0xff]
    %v224 = vld [vmem:[%s5 + $0x18] sm:$0xff]
    %v225 = vld [vmem:[%s6] sm:$0x1]
    %v227 = vlaneseq
    %v228 = vshrl.u32 %v227, 7
    %v229 = vsub.s32 0, %v228
    %v230 = vrot.slane %v225, %v229
    %v232 = vld [vmem:[#allocation2] sm:$0xff]
    %v233 = vmul.f32 %v232, 0.5
    %v234 = vtanh.pop %v233
    %v235 = vmul.f32 %v234, 0.5
    %v236 = vadd.f32 %v235, 0.5
    %v237 = vtanh.pop %v232
    %239 = vrot.lane.b32.xlu0 %v237, 64
    %v240 = vpop.permute.xlu0 %239
    %v242 = vmul.f32 %v236, %v240
    %v243 = vtanh.pop %v242
    %245 = vrot.lane.b32.xlu0 %v243, 96
    %v246 = vpop.permute.xlu0 %245
    %v248 = vmul.f32 %v236, %v246
    %250 = vrot.lane.b32.xlu0 %v248, 32
    %v251 = vpop.permute.xlu0 %250
    %vm252 = vcmask 261120
    %v253 = vsel %vm252, %v251, 0
    %255 = vmatprep.subr.mxu0 0.0
    %256 = vmatpush1.msra.mxu0 %v221
    %257 = vmatprep.subr.mxu0 0.0
    %258 = vmatpush1.msra.mxu0 %v222
    %259 = vmatprep.subr.mxu0 0.0
    %260 = vmatpush1.msra.mxu0 %v223
    %261 = vmatprep.subr.mxu0 0.0
    %262 = vmatpush1.msra.mxu0 %v224
    %263 = vmatprep.subr.mxu0 0.0
    %264 = vmatpush1.msra.mxu0 0.0
    %265 = vmatprep.subr.mxu0 0.0
    %266 = vmatpush1.msra.mxu0 0.0
    %267 = vmatprep.subr.mxu0 0.0
    %268 = vmatpush1.msra.mxu0 0.0
    %269 = vmatprep.subr.mxu0 0.0
    %270 = vmatpush1.msra.mxu0 0.0
    %271 = vmatprep.subr.mxu0 0.0
    %272 = vmatpush1.msra.mxu0 0.0
    %273 = vmatprep.subr.mxu0 0.0
    %274 = vmatpush1.msra.mxu0 0.0
    %275 = vmatprep.subr.mxu0 0.0
    %276 = vmatpush1.msra.mxu0 0.0
    %277 = vmatprep.subr.mxu0 0.0
    %278 = vmatpush1.msra.mxu0 0.0
    %279 = vmatprep.subr.mxu0 0.0
    %280 = vmatpush1.msra.mxu0 0.0
    %281 = vmatprep.subr.mxu0 0.0
    %282 = vmatpush1.msra.mxu0 0.0
    %283 = vmatprep.subr.mxu0 0.0
    %284 = vmatpush1.msra.mxu0 0.0
    %285 = vmatprep.subr.mxu0 0.0
    %286 = vmatpush1.msra.mxu0 0.0
    %287 = vmatprep.subr.mxu0 0.0
    %288 = vmatpush1.msra.mxu0 0.0
    %289 = vmatprep.subr.mxu0 0.0
    %290 = vmatpush1.msra.mxu0 0.0
    %291 = vmatprep.subr.mxu0 0.0
    %292 = vmatpush1.msra.mxu0 0.0
    %293 = vmatprep.subr.mxu0 0.0
    %294 = vmatpush1.msra.mxu0 0.0
    %295 = vmatprep.subr.mxu0 0.0
    %296 = vmatpush1.msra.mxu0 0.0
    %297 = vmatprep.subr.mxu0 0.0
    %298 = vmatpush1.msra.mxu0 0.0
    %299 = vmatprep.subr.mxu0 0.0
    %300 = vmatpush1.msra.mxu0 0.0
    %301 = vmatprep.subr.mxu0 0.0
    %302 = vmatpush1.msra.mxu0 0.0
    %303 = vmatprep.subr.mxu0 0.0
    %304 = vmatpush1.msra.mxu0 0.0
    %305 = vmatprep.subr.mxu0 0.0
    %306 = vmatpush1.msra.mxu0 0.0
    %307 = vmatprep.subr.mxu0 0.0
    %308 = vmatpush1.msra.mxu0 0.0
    %309 = vmatprep.subr.mxu0 0.0
    %310 = vmatpush1.msra.mxu0 0.0
    %311 = vmatprep.subr.mxu0 0.0
    %312 = vmatpush1.msra.mxu0 0.0
    %313 = vmatprep.subr.mxu0 0.0
    %314 = vmatpush1.msra.mxu0 0.0
    %315 = vmatprep.subr.mxu0 0.0
    %316 = vmatpush1.msra.mxu0 0.0
    %317 = vmatprep.subr.mxu0 0.0
    %318 = vmatpush1.msra.mxu0 0.0
    %319 = vmatprep.mubr.f32.mxu0 0.0
    %320 = vmatmul.mubr.f32.gmra.mrb[0].mxu0 %v253
    %v321 = vpop.f32.mrb[0].mxu0
    %v322 = vadd.f32 %v230, %v321
    %v323 = vpop.f32.mrb[0].mxu0
    %324 = vdwg.mxu0
    %v325 = vmul.f32 %v322, 0.5
    %v326 = vtanh.pop %v325
    %v327 = vmul.f32 %v326, 0.5
    %v328 = vadd.f32 %v327, 0.5
    %v329 = vtanh.pop %v322
    %331 = vrot.lane.b32.xlu0 %v329, 64
    %v332 = vpop.permute.xlu0 %331
    %v334 = vmul.f32 %v328, %v332
    %v335 = vtanh.pop %v334
    %337 = vrot.lane.b32.xlu0 %v335, 96
    %v338 = vpop.permute.xlu0 %337
    %v340 = vmul.f32 %v328, %v338
    %341 = vmatprep.subr.mxu0 0.0
    %342 = vmatpush1.msra.mxu0 %v213
    %343 = vmatprep.subr.mxu0 0.0
    %344 = vmatpush1.msra.mxu0 %v214
    %345 = vmatprep.subr.mxu0 0.0
    %346 = vmatpush1.msra.mxu0 %v215
    %347 = vmatprep.subr.mxu0 0.0
    %348 = vmatpush1.msra.mxu0 %v216
    %349 = vmatprep.subr.mxu0 0.0
    %350 = vmatpush1.msra.mxu0 0.0
    %351 = vmatprep.subr.mxu0 0.0
    %352 = vmatpush1.msra.mxu0 0.0
    %353 = vmatprep.subr.mxu0 0.0
    %354 = vmatpush1.msra.mxu0 0.0
    %355 = vmatprep.subr.mxu0 0.0
    %356 = vmatpush1.msra.mxu0 0.0
    %357 = vmatprep.subr.mxu0 0.0
    %358 = vmatpush1.msra.mxu0 0.0
    %359 = vmatprep.subr.mxu0 0.0
    %360 = vmatpush1.msra.mxu0 0.0
    %361 = vmatprep.subr.mxu0 0.0
    %362 = vmatpush1.msra.mxu0 0.0
    %363 = vmatprep.subr.mxu0 0.0
    %364 = vmatpush1.msra.mxu0 0.0
    %365 = vmatprep.subr.mxu0 0.0
    %366 = vmatpush1.msra.mxu0 0.0
    %367 = vmatprep.subr.mxu0 0.0
    %368 = vmatpush1.msra.mxu0 0.0
    %369 = vmatprep.subr.mxu0 0.0
    %370 = vmatpush1.msra.mxu0 0.0
    %371 = vmatprep.subr.mxu0 0.0
    %372 = vmatpush1.msra.mxu0 0.0
    %373 = vmatprep.subr.mxu0 0.0
    %374 = vmatpush1.msra.mxu0 0.0
    %375 = vmatprep.subr.mxu0 0.0
    %376 = vmatpush1.msra.mxu0 0.0
    %377 = vmatprep.subr.mxu0 0.0
    %378 = vmatpush1.msra.mxu0 0.0
    %379 = vmatprep.subr.mxu0 0.0
    %380 = vmatpush1.msra.mxu0 0.0
    %381 = vmatprep.subr.mxu0 0.0
    %382 = vmatpush1.msra.mxu0 0.0
    %383 = vmatprep.subr.mxu0 0.0
    %384 = vmatpush1.msra.mxu0 0.0
    %385 = vmatprep.subr.mxu0 0.0
    %386 = vmatpush1.msra.mxu0 0.0
    %387 = vmatprep.subr.mxu0 0.0
    %388 = vmatpush1.msra.mxu0 0.0
    %389 = vmatprep.subr.mxu0 0.0
    %390 = vmatpush1.msra.mxu0 0.0
    %391 = vmatprep.subr.mxu0 0.0
    %392 = vmatpush1.msra.mxu0 0.0
    %393 = vmatprep.subr.mxu0 0.0
    %394 = vmatpush1.msra.mxu0 0.0
    %395 = vmatprep.subr.mxu0 0.0
    %396 = vmatpush1.msra.mxu0 0.0
    %397 = vmatprep.subr.mxu0 0.0
    %398 = vmatpush1.msra.mxu0 0.0
    %399 = vmatprep.subr.mxu0 0.0
    %400 = vmatpush1.msra.mxu0 0.0
    %401 = vmatprep.subr.mxu0 0.0
    %402 = vmatpush1.msra.mxu0 0.0
    %403 = vmatprep.subr.mxu0 0.0
    %404 = vmatpush1.msra.mxu0 0.0
    %405 = vmatprep.mubr.f32.mxu0 0.0
    %406 = vmatmul.mubr.f32.gmra.mrb[0].mxu0 %v253
    %v407 = vpop.f32.mrb[0].mxu0
    %v408 = vadd.f32 0.0, %v407
    %v409 = vpop.f32.mrb[0].mxu0
    %410 = vdwg.mxu0
    %412 = vrot.lane.b32.xlu0 %v340, 32
    %v413 = vpop.permute.xlu0 %412
    %v414 = vsel %vm252, %v413, 0
    %416 = vmatprep.subr.mxu0 0.0
    %417 = vmatpush1.msra.mxu0 %v217
    %418 = vmatprep.subr.mxu0 0.0
    %419 = vmatpush1.msra.mxu0 %v218
    %420 = vmatprep.subr.mxu0 0.0
    %421 = vmatpush1.msra.mxu0 %v219
    %422 = vmatprep.subr.mxu0 0.0
    %423 = vmatpush1.msra.mxu0 %v220
    %424 = vmatprep.subr.mxu0 0.0
    %425 = vmatpush1.msra.mxu0 0.0
    %426 = vmatprep.subr.mxu0 0.0
    %427 = vmatpush1.msra.mxu0 0.0
    %428 = vmatprep.subr.mxu0 0.0
    %429 = vmatpush1.msra.mxu0 0.0
    %430 = vmatprep.subr.mxu0 0.0
    %431 = vmatpush1.msra.mxu0 0.0
    %432 = vmatprep.subr.mxu0 0.0
    %433 = vmatpush1.msra.mxu0 0.0
    %434 = vmatprep.subr.mxu0 0.0
    %435 = vmatpush1.msra.mxu0 0.0
    %436 = vmatprep.subr.mxu0 0.0
    %437 = vmatpush1.msra.mxu0 0.0
    %438 = vmatprep.subr.mxu0 0.0
    %439 = vmatpush1.msra.mxu0 0.0
    %440 = vmatprep.subr.mxu0 0.0
    %441 = vmatpush1.msra.mxu0 0.0
    %442 = vmatprep.subr.mxu0 0.0
    %443 = vmatpush1.msra.mxu0 0.0
    %444 = vmatprep.subr.mxu0 0.0
    %445 = vmatpush1.msra.mxu0 0.0
    %446 = vmatprep.subr.mxu0 0.0
    %447 = vmatpush1.msra.mxu0 0.0
    %448 = vmatprep.subr.mxu0 0.0
    %449 = vmatpush1.msra.mxu0 0.0
    %450 = vmatprep.subr.mxu0 0.0
    %451 = vmatpush1.msra.mxu0 0.0
    %452 = vmatprep.subr.mxu0 0.0
    %453 = vmatpush1.msra.mxu0 0.0
    %454 = vmatprep.subr.mxu0 0.0
    %455 = vmatpush1.msra.mxu0 0.0
    %456 = vmatprep.subr.mxu0 0.0
    %457 = vmatpush1.msra.mxu0 0.0
    %458 = vmatprep.subr.mxu0 0.0
    %459 = vmatpush1.msra.mxu0 0.0
    %460 = vmatprep.subr.mxu0 0.0
    %461 = vmatpush1.msra.mxu0 0.0
    %462 = vmatprep.subr.mxu0 0.0
    %463 = vmatpush1.msra.mxu0 0.0
    %464 = vmatprep.subr.mxu0 0.0
    %465 = vmatpush1.msra.mxu0 0.0
    %466 = vmatprep.subr.mxu0 0.0
    %467 = vmatpush1.msra.mxu0 0.0
    %468 = vmatprep.subr.mxu0 0.0
    %469 = vmatpush1.msra.mxu0 0.0
    %470 = vmatprep.subr.mxu0 0.0
    %471 = vmatpush1.msra.mxu0 0.0
    %472 = vmatprep.subr.mxu0 0.0
    %473 = vmatpush1.msra.mxu0 0.0
    %474 = vmatprep.subr.mxu0 0.0
    %475 = vmatpush1.msra.mxu0 0.0
    %476 = vmatprep.subr.mxu0 0.0
    %477 = vmatpush1.msra.mxu0 0.0
    %478 = vmatprep.subr.mxu0 0.0
    %479 = vmatpush1.msra.mxu0 0.0
    %480 = vmatprep.mubr.f32.mxu0 0.0
    %481 = vmatmul.mubr.f32.gmra.mrb[0].mxu0 %v414
    %v482 = vpop.f32.mrb[0].mxu0
    %v483 = vadd.f32 0.0, %v482
    %v484 = vpop.f32.mrb[0].mxu0
    %485 = vdwg.mxu0
    %s486 = scalar_lea.vmem [#allocation2], 8
    %v487 = vld [vmem:[%s486] sm:$0xff]
    %v488 = vadd.f32 %v487, %v408
    %v489 = vmul.f32 %v488, 0.5
    %v490 = vtanh.pop %v489
    %v491 = vmul.f32 %v490, 0.5
    %v492 = vadd.f32 %v491, 0.5
    %v493 = vtanh.pop %v488
    %495 = vrot.lane.b32.xlu0 %v242, 32
    %v496 = vpop.permute.xlu0 %495
    %v498 = vmul.f32 %v492, %v496
    %500 = vrot.lane.b32.xlu0 %v493, 64
    %v501 = vpop.permute.xlu0 %500
    %v503 = vmul.f32 %v492, %v501
    %505 = vrot.lane.b32.xlu0 %v503, 32
    %v506 = vpop.permute.xlu0 %505
    %v508 = vadd.f32 %v498, %v506
    %v509 = vtanh.pop %v508
    %511 = vrot.lane.b32.xlu0 %v509, 64
    %v512 = vpop.permute.xlu0 %511
    %v514 = vmul.f32 %v492, %v512
    %516 = vrot.lane.b32.xlu0 %v514, 32
    %v517 = vpop.permute.xlu0 %516
    %v518 = vsel %vm252, %v517, 0
    %520 = vmatprep.subr.mxu0 0.0
    %521 = vmatpush1.msra.mxu0 %v213
    %522 = vmatprep.subr.mxu0 0.0
    %523 = vmatpush1.msra.mxu0 %v214
    %524 = vmatprep.subr.mxu0 0.0
    %525 = vmatpush1.msra.mxu0 %v215
    %526 = vmatprep.subr.mxu0 0.0
    %527 = vmatpush1.msra.mxu0 %v216
    %528 = vmatprep.subr.mxu0 0.0
    %529 = vmatpush1.msra.mxu0 0.0
    %530 = vmatprep.subr.mxu0 0.0
    %531 = vmatpush1.msra.mxu0 0.0
    %532 = vmatprep.subr.mxu0 0.0
    %533 = vmatpush1.msra.mxu0 0.0
    %534 = vmatprep.subr.mxu0 0.0
    %535 = vmatpush1.msra.mxu0 0.0
    %536 = vmatprep.subr.mxu0 0.0
    %537 = vmatpush1.msra.mxu0 0.0
    %538 = vmatprep.subr.mxu0 0.0
    %539 = vmatpush1.msra.mxu0 0.0
    %540 = vmatprep.subr.mxu0 0.0
    %541 = vmatpush1.msra.mxu0 0.0
    %542 = vmatprep.subr.mxu0 0.0
    %543 = vmatpush1.msra.mxu0 0.0
    %544 = vmatprep.subr.mxu0 0.0
    %545 = vmatpush1.msra.mxu0 0.0
    %546 = vmatprep.subr.mxu0 0.0
    %547 = vmatpush1.msra.mxu0 0.0
    %548 = vmatprep.subr.mxu0 0.0
    %549 = vmatpush1.msra.mxu0 0.0
    %550 = vmatprep.subr.mxu0 0.0
    %551 = vmatpush1.msra.mxu0 0.0
    %552 = vmatprep.subr.mxu0 0.0
    %553 = vmatpush1.msra.mxu0 0.0
    %554 = vmatprep.subr.mxu0 0.0
    %555 = vmatpush1.msra.mxu0 0.0
    %556 = vmatprep.subr.mxu0 0.0
    %557 = vmatpush1.msra.mxu0 0.0
    %558 = vmatprep.subr.mxu0 0.0
    %559 = vmatpush1.msra.mxu0 0.0
    %560 = vmatprep.subr.mxu0 0.0
    %561 = vmatpush1.msra.mxu0 0.0
    %562 = vmatprep.subr.mxu0 0.0
    %563 = vmatpush1.msra.mxu0 0.0
    %564 = vmatprep.subr.mxu0 0.0
    %565 = vmatpush1.msra.mxu0 0.0
    %566 = vmatprep.subr.mxu0 0.0
    %567 = vmatpush1.msra.mxu0 0.0
    %568 = vmatprep.subr.mxu0 0.0
    %569 = vmatpush1.msra.mxu0 0.0
    %570 = vmatprep.subr.mxu0 0.0
    %571 = vmatpush1.msra.mxu0 0.0
    %572 = vmatprep.subr.mxu0 0.0
    %573 = vmatpush1.msra.mxu0 0.0
    %574 = vmatprep.subr.mxu0 0.0
    %575 = vmatpush1.msra.mxu0 0.0
    %576 = vmatprep.subr.mxu0 0.0
    %577 = vmatpush1.msra.mxu0 0.0
    %578 = vmatprep.subr.mxu0 0.0
    %579 = vmatpush1.msra.mxu0 0.0
    %580 = vmatprep.subr.mxu0 0.0
    %581 = vmatpush1.msra.mxu0 0.0
    %582 = vmatprep.subr.mxu0 0.0
    %583 = vmatpush1.msra.mxu0 0.0
    %584 = vmatprep.mubr.f32.mxu0 0.0
    %585 = vmatmul.mubr.f32.gmra.mrb[0].mxu0 %v518
    %v586 = vpop.f32.mrb[0].mxu0
    %v587 = vadd.f32 0.0, %v586
    %v588 = vpop.f32.mrb[0].mxu0
    %589 = vdwg.mxu0
    %590 = vmatprep.subr.mxu0 0.0
    %591 = vmatpush1.msra.mxu0 %v221
    %592 = vmatprep.subr.mxu0 0.0
    %593 = vmatpush1.msra.mxu0 %v222
    %594 = vmatprep.subr.mxu0 0.0
    %595 = vmatpush1.msra.mxu0 %v223
    %596 = vmatprep.subr.mxu0 0.0
    %597 = vmatpush1.msra.mxu0 %v224
    %598 = vmatprep.subr.mxu0 0.0
    %599 = vmatpush1.msra.mxu0 0.0
    %600 = vmatprep.subr.mxu0 0.0
    %601 = vmatpush1.msra.mxu0 0.0
    %602 = vmatprep.subr.mxu0 0.0
    %603 = vmatpush1.msra.mxu0 0.0
    %604 = vmatprep.subr.mxu0 0.0
    %605 = vmatpush1.msra.mxu0 0.0
    %606 = vmatprep.subr.mxu0 0.0
    %607 = vmatpush1.msra.mxu0 0.0
    %608 = vmatprep.subr.mxu0 0.0
    %609 = vmatpush1.msra.mxu0 0.0
    %610 = vmatprep.subr.mxu0 0.0
    %611 = vmatpush1.msra.mxu0 0.0
    %612 = vmatprep.subr.mxu0 0.0
    %613 = vmatpush1.msra.mxu0 0.0
    %614 = vmatprep.subr.mxu0 0.0
    %615 = vmatpush1.msra.mxu0 0.0
    %616 = vmatprep.subr.mxu0 0.0
    %617 = vmatpush1.msra.mxu0 0.0
    %618 = vmatprep.subr.mxu0 0.0
    %619 = vmatpush1.msra.mxu0 0.0
    %620 = vmatprep.subr.mxu0 0.0
    %621 = vmatpush1.msra.mxu0 0.0
    %622 = vmatprep.subr.mxu0 0.0
    %623 = vmatpush1.msra.mxu0 0.0
    %624 = vmatprep.subr.mxu0 0.0
    %625 = vmatpush1.msra.mxu0 0.0
    %626 = vmatprep.subr.mxu0 0.0
    %627 = vmatpush1.msra.mxu0 0.0
    %628 = vmatprep.subr.mxu0 0.0
    %629 = vmatpush1.msra.mxu0 0.0
    %630 = vmatprep.subr.mxu0 0.0
    %631 = vmatpush1.msra.mxu0 0.0
    %632 = vmatprep.subr.mxu0 0.0
    %633 = vmatpush1.msra.mxu0 0.0
    %634 = vmatprep.subr.mxu0 0.0
    %635 = vmatpush1.msra.mxu0 0.0
    %636 = vmatprep.subr.mxu0 0.0
    %637 = vmatpush1.msra.mxu0 0.0
    %638 = vmatprep.subr.mxu0 0.0
    %639 = vmatpush1.msra.mxu0 0.0
    %640 = vmatprep.subr.mxu0 0.0
    %641 = vmatpush1.msra.mxu0 0.0
    %642 = vmatprep.subr.mxu0 0.0
    %643 = vmatpush1.msra.mxu0 0.0
    %644 = vmatprep.subr.mxu0 0.0
    %645 = vmatpush1.msra.mxu0 0.0
    %646 = vmatprep.subr.mxu0 0.0
    %647 = vmatpush1.msra.mxu0 0.0
    %648 = vmatprep.subr.mxu0 0.0
    %649 = vmatpush1.msra.mxu0 0.0
    %650 = vmatprep.subr.mxu0 0.0
    %651 = vmatpush1.msra.mxu0 0.0
    %652 = vmatprep.subr.mxu0 0.0
    %653 = vmatpush1.msra.mxu0 0.0
    %654 = vmatprep.mubr.f32.mxu0 0.0
    %655 = vmatmul.mubr.f32.gmra.mrb[0].mxu0 %v518
    %v656 = vpop.f32.mrb[0].mxu0
    %v657 = vadd.f32 %v230, %v656
    %v658 = vpop.f32.mrb[0].mxu0
    %659 = vdwg.mxu0
    %v660 = vadd.f32 %v657, %v483
    %v661 = vmul.f32 %v660, 0.5
    %v662 = vtanh.pop %v661
    %v663 = vmul.f32 %v662, 0.5
    %v664 = vadd.f32 %v663, 0.5
    %v665 = vtanh.pop %v660
    %667 = vrot.lane.b32.xlu0 %v334, 32
    %v668 = vpop.permute.xlu0 %667
    %v670 = vmul.f32 %v664, %v668
    %672 = vrot.lane.b32.xlu0 %v665, 64
    %v673 = vpop.permute.xlu0 %672
    %v675 = vmul.f32 %v664, %v673
    %677 = vrot.lane.b32.xlu0 %v675, 32
    %v678 = vpop.permute.xlu0 %677
    %v680 = vadd.f32 %v670, %v678
    %v681 = vtanh.pop %v680
    %683 = vrot.lane.b32.xlu0 %v681, 64
    %v684 = vpop.permute.xlu0 %683
    %v686 = vmul.f32 %v664, %v684
    %688 = vrot.lane.b32.xlu0 %v686, 32
    %v689 = vpop.permute.xlu0 %688
    %v690 = vsel %vm252, %v689, 0
    %692 = vmatprep.subr.mxu0 0.0
    %693 = vmatpush1.msra.mxu0 %v217
    %694 = vmatprep.subr.mxu0 0.0
    %695 = vmatpush1.msra.mxu0 %v218
    %696 = vmatprep.subr.mxu0 0.0
    %697 = vmatpush1.msra.mxu0 %v219
    %698 = vmatprep.subr.mxu0 0.0
    %699 = vmatpush1.msra.mxu0 %v220
    %700 = vmatprep.subr.mxu0 0.0
    %701 = vmatpush1.msra.mxu0 0.0
    %702 = vmatprep.subr.mxu0 0.0
    %703 = vmatpush1.msra.mxu0 0.0
    %704 = vmatprep.subr.mxu0 0.0
    %705 = vmatpush1.msra.mxu0 0.0
    %706 = vmatprep.subr.mxu0 0.0
    %707 = vmatpush1.msra.mxu0 0.0
    %708 = vmatprep.subr.mxu0 0.0
    %709 = vmatpush1.msra.mxu0 0.0
    %710 = vmatprep.subr.mxu0 0.0
    %711 = vmatpush1.msra.mxu0 0.0
    %712 = vmatprep.subr.mxu0 0.0
    %713 = vmatpush1.msra.mxu0 0.0
    %714 = vmatprep.subr.mxu0 0.0
    %715 = vmatpush1.msra.mxu0 0.0
    %716 = vmatprep.subr.mxu0 0.0
    %717 = vmatpush1.msra.mxu0 0.0
    %718 = vmatprep.subr.mxu0 0.0
    %719 = vmatpush1.msra.mxu0 0.0
    %720 = vmatprep.subr.mxu0 0.0
    %721 = vmatpush1.msra.mxu0 0.0
    %722 = vmatprep.subr.mxu0 0.0
    %723 = vmatpush1.msra.mxu0 0.0
    %724 = vmatprep.subr.mxu0 0.0
    %725 = vmatpush1.msra.mxu0 0.0
    %726 = vmatprep.subr.mxu0 0.0
    %727 = vmatpush1.msra.mxu0 0.0
    %728 = vmatprep.subr.mxu0 0.0
    %729 = vmatpush1.msra.mxu0 0.0
    %730 = vmatprep.subr.mxu0 0.0
    %731 = vmatpush1.msra.mxu0 0.0
    %732 = vmatprep.subr.mxu0 0.0
    %733 = vmatpush1.msra.mxu0 0.0
    %734 = vmatprep.subr.mxu0 0.0
    %735 = vmatpush1.msra.mxu0 0.0
    %736 = vmatprep.subr.mxu0 0.0
    %737 = vmatpush1.msra.mxu0 0.0
    %738 = vmatprep.subr.mxu0 0.0
    %739 = vmatpush1.msra.mxu0 0.0
    %740 = vmatprep.subr.mxu0 0.0
    %741 = vmatpush1.msra.mxu0 0.0
    %742 = vmatprep.subr.mxu0 0.0
    %743 = vmatpush1.msra.mxu0 0.0
    %744 = vmatprep.subr.mxu0 0.0
    %745 = vmatpush1.msra.mxu0 0.0
    %746 = vmatprep.subr.mxu0 0.0
    %747 = vmatpush1.msra.mxu0 0.0
    %748 = vmatprep.subr.mxu0 0.0
    %749 = vmatpush1.msra.mxu0 0.0
    %750 = vmatprep.subr.mxu0 0.0
    %751 = vmatpush1.msra.mxu0 0.0
    %752 = vmatprep.subr.mxu0 0.0
    %753 = vmatpush1.msra.mxu0 0.0
    %754 = vmatprep.subr.mxu0 0.0
    %755 = vmatpush1.msra.mxu0 0.0
    %756 = vmatprep.mubr.f32.mxu0 0.0
    %757 = vmatmul.mubr.f32.gmra.mrb[0].mxu0 %v690
    %v758 = vpop.f32.mrb[0].mxu0
    %v759 = vadd.f32 0.0, %v758
    %v760 = vpop.f32.mrb[0].mxu0
    %761 = vdwg.mxu0
    %s762 = scalar_lea.vmem [#allocation2], 16
    %v763 = vld [vmem:[%s762] sm:$0xff]
    %v764 = vadd.f32 %v763, %v587
    %v765 = vmul.f32 %v764, 0.5
    %v766 = vtanh.pop %v765
    %v767 = vmul.f32 %v766, 0.5
    %v768 = vadd.f32 %v767, 0.5
    %v769 = vtanh.pop %v764
    %v770 = vmul.f32 %v768, %v508
    %772 = vrot.lane.b32.xlu0 %v769, 64
    %v773 = vpop.permute.xlu0 %772
    %v775 = vmul.f32 %v768, %v773
    %777 = vrot.lane.b32.xlu0 %v775, 32
    %v778 = vpop.permute.xlu0 %777
    %v780 = vadd.f32 %v770, %v778
    %v781 = vtanh.pop %v780
    %783 = vrot.lane.b32.xlu0 %v781, 64
    %v784 = vpop.permute.xlu0 %783
    %v786 = vmul.f32 %v768, %v784
    %788 = vrot.lane.b32.xlu0 %v786, 32
    %v789 = vpop.permute.xlu0 %788
    %v790 = vsel %vm252, %v789, 0
    %792 = vmatprep.subr.mxu0 0.0
    %793 = vmatpush1.msra.mxu0 %v213
    %794 = vmatprep.subr.mxu0 0.0
    %795 = vmatpush1.msra.mxu0 %v214
    %796 = vmatprep.subr.mxu0 0.0
    %797 = vmatpush1.msra.mxu0 %v215
    %798 = vmatprep.subr.mxu0 0.0
    %799 = vmatpush1.msra.mxu0 %v216
    %800 = vmatprep.subr.mxu0 0.0
    %801 = vmatpush1.msra.mxu0 0.0
    %802 = vmatprep.subr.mxu0 0.0
    %803 = vmatpush1.msra.mxu0 0.0
    %804 = vmatprep.subr.mxu0 0.0
    %805 = vmatpush1.msra.mxu0 0.0
    %806 = vmatprep.subr.mxu0 0.0
    %807 = vmatpush1.msra.mxu0 0.0
    %808 = vmatprep.subr.mxu0 0.0
    %809 = vmatpush1.msra.mxu0 0.0
    %810 = vmatprep.subr.mxu0 0.0
    %811 = vmatpush1.msra.mxu0 0.0
    %812 = vmatprep.subr.mxu0 0.0
    %813 = vmatpush1.msra.mxu0 0.0
    %814 = vmatprep.subr.mxu0 0.0
    %815 = vmatpush1.msra.mxu0 0.0
    %816 = vmatprep.subr.mxu0 0.0
    %817 = vmatpush1.msra.mxu0 0.0
    %818 = vmatprep.subr.mxu0 0.0
    %819 = vmatpush1.msra.mxu0 0.0
    %820 = vmatprep.subr.mxu0 0.0
    %821 = vmatpush1.msra.mxu0 0.0
    %822 = vmatprep.subr.mxu0 0.0
    %823 = vmatpush1.msra.mxu0 0.0
    %824 = vmatprep.subr.mxu0 0.0
    %825 = vmatpush1.msra.mxu0 0.0
    %826 = vmatprep.subr.mxu0 0.0
    %827 = vmatpush1.msra.mxu0 0.0
    %828 = vmatprep.subr.mxu0 0.0
    %829 = vmatpush1.msra.mxu0 0.0
    %830 = vmatprep.subr.mxu0 0.0
    %831 = vmatpush1.msra.mxu0 0.0
    %832 = vmatprep.subr.mxu0 0.0
    %833 = vmatpush1.msra.mxu0 0.0
    %834 = vmatprep.subr.mxu0 0.0
    %835 = vmatpush1.msra.mxu0 0.0
    %836 = vmatprep.subr.mxu0 0.0
    %837 = vmatpush1.msra.mxu0 0.0
    %838 = vmatprep.subr.mxu0 0.0
    %839 = vmatpush1.msra.mxu0 0.0
    %840 = vmatprep.subr.mxu0 0.0
    %841 = vmatpush1.msra.mxu0 0.0
    %842 = vmatprep.subr.mxu0 0.0
    %843 = vmatpush1.msra.mxu0 0.0
    %844 = vmatprep.subr.mxu0 0.0
    %845 = vmatpush1.msra.mxu0 0.0
    %846 = vmatprep.subr.mxu0 0.0
    %847 = vmatpush1.msra.mxu0 0.0
    %848 = vmatprep.subr.mxu0 0.0
    %849 = vmatpush1.msra.mxu0 0.0
    %850 = vmatprep.subr.mxu0 0.0
    %851 = vmatpush1.msra.mxu0 0.0
    %852 = vmatprep.subr.mxu0 0.0
    %853 = vmatpush1.msra.mxu0 0.0
    %854 = vmatprep.subr.mxu0 0.0
    %855 = vmatpush1.msra.mxu0 0.0
    %856 = vmatprep.mubr.f32.mxu0 0.0
    %857 = vmatmul.mubr.f32.gmra.mrb[0].mxu0 %v790
    %v858 = vpop.f32.mrb[0].mxu0
    %v859 = vadd.f32 0.0, %v858
    %v860 = vpop.f32.mrb[0].mxu0
    %861 = vdwg.mxu0
    %862 = vmatprep.subr.mxu0 0.0
    %863 = vmatpush1.msra.mxu0 %v221
    %864 = vmatprep.subr.mxu0 0.0
    %865 = vmatpush1.msra.mxu0 %v222
    %866 = vmatprep.subr.mxu0 0.0
    %867 = vmatpush1.msra.mxu0 %v223
    %868 = vmatprep.subr.mxu0 0.0
    %869 = vmatpush1.msra.mxu0 %v224
    %870 = vmatprep.subr.mxu0 0.0
    %871 = vmatpush1.msra.mxu0 0.0
    %872 = vmatprep.subr.mxu0 0.0
    %873 = vmatpush1.msra.mxu0 0.0
    %874 = vmatprep.subr.mxu0 0.0
    %875 = vmatpush1.msra.mxu0 0.0
    %876 = vmatprep.subr.mxu0 0.0
    %877 = vmatpush1.msra.mxu0 0.0
    %878 = vmatprep.subr.mxu0 0.0
    %879 = vmatpush1.msra.mxu0 0.0
    %880 = vmatprep.subr.mxu0 0.0
    %881 = vmatpush1.msra.mxu0 0.0
    %882 = vmatprep.subr.mxu0 0.0
    %883 = vmatpush1.msra.mxu0 0.0
    %884 = vmatprep.subr.mxu0 0.0
    %885 = vmatpush1.msra.mxu0 0.0
    %886 = vmatprep.subr.mxu0 0.0
    %887 = vmatpush1.msra.mxu0 0.0
    %888 = vmatprep.subr.mxu0 0.0
    %889 = vmatpush1.msra.mxu0 0.0
    %890 = vmatprep.subr.mxu0 0.0
    %891 = vmatpush1.msra.mxu0 0.0
    %892 = vmatprep.subr.mxu0 0.0
    %893 = vmatpush1.msra.mxu0 0.0
    %894 = vmatprep.subr.mxu0 0.0
    %895 = vmatpush1.msra.mxu0 0.0
    %896 = vmatprep.subr.mxu0 0.0
    %897 = vmatpush1.msra.mxu0 0.0
    %898 = vmatprep.subr.mxu0 0.0
    %899 = vmatpush1.msra.mxu0 0.0
    %900 = vmatprep.subr.mxu0 0.0
    %901 = vmatpush1.msra.mxu0 0.0
    %902 = vmatprep.subr.mxu0 0.0
    %903 = vmatpush1.msra.mxu0 0.0
    %904 = vmatprep.subr.mxu0 0.0
    %905 = vmatpush1.msra.mxu0 0.0
    %906 = vmatprep.subr.mxu0 0.0
    %907 = vmatpush1.msra.mxu0 0.0
    %908 = vmatprep.subr.mxu0 0.0
    %909 = vmatpush1.msra.mxu0 0.0
    %910 = vmatprep.subr.mxu0 0.0
    %911 = vmatpush1.msra.mxu0 0.0
    %912 = vmatprep.subr.mxu0 0.0
    %913 = vmatpush1.msra.mxu0 0.0
    %914 = vmatprep.subr.mxu0 0.0
    %915 = vmatpush1.msra.mxu0 0.0
    %916 = vmatprep.subr.mxu0 0.0
    %917 = vmatpush1.msra.mxu0 0.0
    %918 = vmatprep.subr.mxu0 0.0
    %919 = vmatpush1.msra.mxu0 0.0
    %920 = vmatprep.subr.mxu0 0.0
    %921 = vmatpush1.msra.mxu0 0.0
    %922 = vmatprep.subr.mxu0 0.0
    %923 = vmatpush1.msra.mxu0 0.0
    %924 = vmatprep.subr.mxu0 0.0
    %925 = vmatpush1.msra.mxu0 0.0
    %926 = vmatprep.mubr.f32.mxu0 0.0
    %927 = vmatmul.mubr.f32.gmra.mrb[0].mxu0 %v790
    %v928 = vpop.f32.mrb[0].mxu0
    %v929 = vadd.f32 %v230, %v928
    %v930 = vpop.f32.mrb[0].mxu0
    %931 = vdwg.mxu0
    %v932 = vadd.f32 %v929, %v759
    %v933 = vmul.f32 %v932, 0.5
    %v934 = vtanh.pop %v933
    %v935 = vmul.f32 %v934, 0.5
    %v936 = vadd.f32 %v935, 0.5
    %v937 = vtanh.pop %v932
    %v938 = vmul.f32 %v936, %v680
    %940 = vrot.lane.b32.xlu0 %v937, 64
    %v941 = vpop.permute.xlu0 %940
    %v943 = vmul.f32 %v936, %v941
    %945 = vrot.lane.b32.xlu0 %v943, 32
    %v946 = vpop.permute.xlu0 %945
    %v948 = vadd.f32 %v938, %v946
    %v949 = vtanh.pop %v948
    %951 = vrot.lane.b32.xlu0 %v949, 64
    %v952 = vpop.permute.xlu0 %951
    %v954 = vmul.f32 %v936, %v952
    %956 = vrot.lane.b32.xlu0 %v954, 32
    %v957 = vpop.permute.xlu0 %956
    %v958 = vsel %vm252, %v957, 0
    %960 = vmatprep.subr.mxu0 0.0
    %961 = vmatpush1.msra.mxu0 %v217
    %962 = vmatprep.subr.mxu0 0.0
    %963 = vmatpush1.msra.mxu0 %v218
    %964 = vmatprep.subr.mxu0 0.0
    %965 = vmatpush1.msra.mxu0 %v219
    %966 = vmatprep.subr.mxu0 0.0
    %967 = vmatpush1.msra.mxu0 %v220
    %968 = vmatprep.subr.mxu0 0.0
    %969 = vmatpush1.msra.mxu0 0.0
    %970 = vmatprep.subr.mxu0 0.0
    %971 = vmatpush1.msra.mxu0 0.0
    %972 = vmatprep.subr.mxu0 0.0
    %973 = vmatpush1.msra.mxu0 0.0
    %974 = vmatprep.subr.mxu0 0.0
    %975 = vmatpush1.msra.mxu0 0.0
    %976 = vmatprep.subr.mxu0 0.0
    %977 = vmatpush1.msra.mxu0 0.0
    %978 = vmatprep.subr.mxu0 0.0
    %979 = vmatpush1.msra.mxu0 0.0
    %980 = vmatprep.subr.mxu0 0.0
    %981 = vmatpush1.msra.mxu0 0.0
    %982 = vmatprep.subr.mxu0 0.0
    %983 = vmatpush1.msra.mxu0 0.0
    %984 = vmatprep.subr.mxu0 0.0
    %985 = vmatpush1.msra.mxu0 0.0
    %986 = vmatprep.subr.mxu0 0.0
    %987 = vmatpush1.msra.mxu0 0.0
    %988 = vmatprep.subr.mxu0 0.0
    %989 = vmatpush1.msra.mxu0 0.0
    %990 = vmatprep.subr.mxu0 0.0
    %991 = vmatpush1.msra.mxu0 0.0
    %992 = vmatprep.subr.mxu0 0.0
    %993 = vmatpush1.msra.mxu0 0.0
    %994 = vmatprep.subr.mxu0 0.0
    %995 = vmatpush1.msra.mxu0 0.0
    %996 = vmatprep.subr.mxu0 0.0
    %997 = vmatpush1.msra.mxu0 0.0
    %998 = vmatprep.subr.mxu0 0.0
    %999 = vmatpush1.msra.mxu0 0.0
    %1000 = vmatprep.subr.mxu0 0.0
    %1001 = vmatpush1.msra.mxu0 0.0
    %1002 = vmatprep.subr.mxu0 0.0
    %1003 = vmatpush1.msra.mxu0 0.0
    %1004 = vmatprep.subr.mxu0 0.0
    %1005 = vmatpush1.msra.mxu0 0.0
    %1006 = vmatprep.subr.mxu0 0.0
    %1007 = vmatpush1.msra.mxu0 0.0
    %1008 = vmatprep.subr.mxu0 0.0
    %1009 = vmatpush1.msra.mxu0 0.0
    %1010 = vmatprep.subr.mxu0 0.0
    %1011 = vmatpush1.msra.mxu0 0.0
    %1012 = vmatprep.subr.mxu0 0.0
    %1013 = vmatpush1.msra.mxu0 0.0
    %1014 = vmatprep.subr.mxu0 0.0
    %1015 = vmatpush1.msra.mxu0 0.0
    %1016 = vmatprep.subr.mxu0 0.0
    %1017 = vmatpush1.msra.mxu0 0.0
    %1018 = vmatprep.subr.mxu0 0.0
    %1019 = vmatpush1.msra.mxu0 0.0
    %1020 = vmatprep.subr.mxu0 0.0
    %1021 = vmatpush1.msra.mxu0 0.0
    %1022 = vmatprep.subr.mxu0 0.0
    %1023 = vmatpush1.msra.mxu0 0.0
    %1024 = vmatprep.mubr.f32.mxu0 0.0
    %1025 = vmatmul.mubr.f32.gmra.mrb[0].mxu0 %v958
    %v1026 = vpop.f32.mrb[0].mxu0
    %v1027 = vadd.f32 0.0, %v1026
    %v1028 = vpop.f32.mrb[0].mxu0
    %1029 = vdwg.mxu0
    %s1030 = scalar_lea.vmem [#allocation2], 24
    %v1031 = vld [vmem:[%s1030] sm:$0xff]
    %v1032 = vadd.f32 %v1031, %v859
    %v1033 = vmul.f32 %v1032, 0.5
    %v1034 = vtanh.pop %v1033
    %v1035 = vmul.f32 %v1034, 0.5
    %v1036 = vadd.f32 %v1035, 0.5
    %v1037 = vtanh.pop %v1032
    %v1038 = vmul.f32 %v1036, %v780
    %1040 = vrot.lane.b32.xlu0 %v1037, 64
    %v1041 = vpop.permute.xlu0 %1040
    %v1043 = vmul.f32 %v1036, %v1041
    %1045 = vrot.lane.b32.xlu0 %v1043, 32
    %v1046 = vpop.permute.xlu0 %1045
    %v1048 = vadd.f32 %v1038, %v1046
    %v1049 = vtanh.pop %v1048
    %1051 = vrot.lane.b32.xlu0 %v1049, 64
    %v1052 = vpop.permute.xlu0 %1051
    %v1054 = vmul.f32 %v1036, %v1052
    %1056 = vrot.lane.b32.xlu0 %v1054, 32
    %v1057 = vpop.permute.xlu0 %1056
    %v1058 = vsel %vm252, %v1057, 0
    %1060 = vmatprep.subr.mxu0 0.0
    %1061 = vmatpush1.msra.mxu0 %v213
    %1062 = vmatprep.subr.mxu0 0.0
    %1063 = vmatpush1.msra.mxu0 %v214
    %1064 = vmatprep.subr.mxu0 0.0
    %1065 = vmatpush1.msra.mxu0 %v215
    %1066 = vmatprep.subr.mxu0 0.0
    %1067 = vmatpush1.msra.mxu0 %v216
    %1068 = vmatprep.subr.mxu0 0.0
    %1069 = vmatpush1.msra.mxu0 0.0
    %1070 = vmatprep.subr.mxu0 0.0
    %1071 = vmatpush1.msra.mxu0 0.0
    %1072 = vmatprep.subr.mxu0 0.0
    %1073 = vmatpush1.msra.mxu0 0.0
    %1074 = vmatprep.subr.mxu0 0.0
    %1075 = vmatpush1.msra.mxu0 0.0
    %1076 = vmatprep.subr.mxu0 0.0
    %1077 = vmatpush1.msra.mxu0 0.0
    %1078 = vmatprep.subr.mxu0 0.0
    %1079 = vmatpush1.msra.mxu0 0.0
    %1080 = vmatprep.subr.mxu0 0.0
    %1081 = vmatpush1.msra.mxu0 0.0
    %1082 = vmatprep.subr.mxu0 0.0
    %1083 = vmatpush1.msra.mxu0 0.0
    %1084 = vmatprep.subr.mxu0 0.0
    %1085 = vmatpush1.msra.mxu0 0.0
    %1086 = vmatprep.subr.mxu0 0.0
    %1087 = vmatpush1.msra.mxu0 0.0
    %1088 = vmatprep.subr.mxu0 0.0
    %1089 = vmatpush1.msra.mxu0 0.0
    %1090 = vmatprep.subr.mxu0 0.0
    %1091 = vmatpush1.msra.mxu0 0.0
    %1092 = vmatprep.subr.mxu0 0.0
    %1093 = vmatpush1.msra.mxu0 0.0
    %1094 = vmatprep.subr.mxu0 0.0
    %1095 = vmatpush1.msra.mxu0 0.0
    %1096 = vmatprep.subr.mxu0 0.0
    %1097 = vmatpush1.msra.mxu0 0.0
    %1098 = vmatprep.subr.mxu0 0.0
    %1099 = vmatpush1.msra.mxu0 0.0
    %1100 = vmatprep.subr.mxu0 0.0
    %1101 = vmatpush1.msra.mxu0 0.0
    %1102 = vmatprep.subr.mxu0 0.0
    %1103 = vmatpush1.msra.mxu0 0.0
    %1104 = vmatprep.subr.mxu0 0.0
    %1105 = vmatpush1.msra.mxu0 0.0
    %1106 = vmatprep.subr.mxu0 0.0
    %1107 = vmatpush1.msra.mxu0 0.0
    %1108 = vmatprep.subr.mxu0 0.0
    %1109 = vmatpush1.msra.mxu0 0.0
    %1110 = vmatprep.subr.mxu0 0.0
    %1111 = vmatpush1.msra.mxu0 0.0
    %1112 = vmatprep.subr.mxu0 0.0
    %1113 = vmatpush1.msra.mxu0 0.0
    %1114 = vmatprep.subr.mxu0 0.0
    %1115 = vmatpush1.msra.mxu0 0.0
    %1116 = vmatprep.subr.mxu0 0.0
    %1117 = vmatpush1.msra.mxu0 0.0
    %1118 = vmatprep.subr.mxu0 0.0
    %1119 = vmatpush1.msra.mxu0 0.0
    %1120 = vmatprep.subr.mxu0 0.0
    %1121 = vmatpush1.msra.mxu0 0.0
    %1122 = vmatprep.subr.mxu0 0.0
    %1123 = vmatpush1.msra.mxu0 0.0
    %1124 = vmatprep.mubr.f32.mxu0 0.0
    %1125 = vmatmul.mubr.f32.gmra.mrb[0].mxu0 %v1058
    %v1126 = vpop.f32.mrb[0].mxu0
    %v1127 = vadd.f32 0.0, %v1126
    %v1128 = vpop.f32.mrb[0].mxu0
    %1129 = vdwg.mxu0
    %1130 = vmatprep.subr.mxu0 0.0
    %1131 = vmatpush1.msra.mxu0 %v221
    %1132 = vmatprep.subr.mxu0 0.0
    %1133 = vmatpush1.msra.mxu0 %v222
    %1134 = vmatprep.subr.mxu0 0.0
    %1135 = vmatpush1.msra.mxu0 %v223
    %1136 = vmatprep.subr.mxu0 0.0
    %1137 = vmatpush1.msra.mxu0 %v224
    %1138 = vmatprep.subr.mxu0 0.0
    %1139 = vmatpush1.msra.mxu0 0.0
    %1140 = vmatprep.subr.mxu0 0.0
    %1141 = vmatpush1.msra.mxu0 0.0
    %1142 = vmatprep.subr.mxu0 0.0
    %1143 = vmatpush1.msra.mxu0 0.0
    %1144 = vmatprep.subr.mxu0 0.0
    %1145 = vmatpush1.msra.mxu0 0.0
    %1146 = vmatprep.subr.mxu0 0.0
    %1147 = vmatpush1.msra.mxu0 0.0
    %1148 = vmatprep.subr.mxu0 0.0
    %1149 = vmatpush1.msra.mxu0 0.0
    %1150 = vmatprep.subr.mxu0 0.0
    %1151 = vmatpush1.msra.mxu0 0.0
    %1152 = vmatprep.subr.mxu0 0.0
    %1153 = vmatpush1.msra.mxu0 0.0
    %1154 = vmatprep.subr.mxu0 0.0
    %1155 = vmatpush1.msra.mxu0 0.0
    %1156 = vmatprep.subr.mxu0 0.0
    %1157 = vmatpush1.msra.mxu0 0.0
    %1158 = vmatprep.subr.mxu0 0.0
    %1159 = vmatpush1.msra.mxu0 0.0
    %1160 = vmatprep.subr.mxu0 0.0
    %1161 = vmatpush1.msra.mxu0 0.0
    %1162 = vmatprep.subr.mxu0 0.0
    %1163 = vmatpush1.msra.mxu0 0.0
    %1164 = vmatprep.subr.mxu0 0.0
    %1165 = vmatpush1.msra.mxu0 0.0
    %1166 = vmatprep.subr.mxu0 0.0
    %1167 = vmatpush1.msra.mxu0 0.0
    %1168 = vmatprep.subr.mxu0 0.0
    %1169 = vmatpush1.msra.mxu0 0.0
    %1170 = vmatprep.subr.mxu0 0.0
    %1171 = vmatpush1.msra.mxu0 0.0
    %1172 = vmatprep.subr.mxu0 0.0
    %1173 = vmatpush1.msra.mxu0 0.0
    %1174 = vmatprep.subr.mxu0 0.0
    %1175 = vmatpush1.msra.mxu0 0.0
    %1176 = vmatprep.subr.mxu0 0.0
    %1177 = vmatpush1.msra.mxu0 0.0
    %1178 = vmatprep.subr.mxu0 0.0
    %1179 = vmatpush1.msra.mxu0 0.0
    %1180 = vmatprep.subr.mxu0 0.0
    %1181 = vmatpush1.msra.mxu0 0.0
    %1182 = vmatprep.subr.mxu0 0.0
    %1183 = vmatpush1.msra.mxu0 0.0
    %1184 = vmatprep.subr.mxu0 0.0
    %1185 = vmatpush1.msra.mxu0 0.0
    %1186 = vmatprep.subr.mxu0 0.0
    %1187 = vmatpush1.msra.mxu0 0.0
    %1188 = vmatprep.subr.mxu0 0.0
    %1189 = vmatpush1.msra.mxu0 0.0
    %1190 = vmatprep.subr.mxu0 0.0
    %1191 = vmatpush1.msra.mxu0 0.0
    %1192 = vmatprep.subr.mxu0 0.0
    %1193 = vmatpush1.msra.mxu0 0.0
    %1194 = vmatprep.mubr.f32.mxu0 0.0
    %1195 = vmatmul.mubr.f32.gmra.mrb[0].mxu0 %v1058
    %v1196 = vpop.f32.mrb[0].mxu0
    %v1197 = vadd.f32 %v230, %v1196
    %v1198 = vpop.f32.mrb[0].mxu0
    %1199 = vdwg.mxu0
    %v1200 = vadd.f32 %v1197, %v1027
    %v1201 = vmul.f32 %v1200, 0.5
    %v1202 = vtanh.pop %v1201
    %v1203 = vmul.f32 %v1202, 0.5
    %v1204 = vadd.f32 %v1203, 0.5
    %v1205 = vtanh.pop %v1200
    %v1206 = vmul.f32 %v1204, %v948
    %1208 = vrot.lane.b32.xlu0 %v1205, 64
    %v1209 = vpop.permute.xlu0 %1208
    %v1211 = vmul.f32 %v1204, %v1209
    %1213 = vrot.lane.b32.xlu0 %v1211, 32
    %v1214 = vpop.permute.xlu0 %1213
    %v1216 = vadd.f32 %v1206, %v1214
    %v1217 = vtanh.pop %v1216
    %1219 = vrot.lane.b32.xlu0 %v1217, 64
    %v1220 = vpop.permute.xlu0 %1219
    %v1222 = vmul.f32 %v1204, %v1220
    %1224 = vrot.lane.b32.xlu0 %v1222, 32
    %v1225 = vpop.permute.xlu0 %1224
    %v1226 = vsel %vm252, %v1225, 0
    %1228 = vmatprep.subr.mxu0 0.0
    %1229 = vmatpush1.msra.mxu0 %v217
    %1230 = vmatprep.subr.mxu0 0.0
    %1231 = vmatpush1.msra.mxu0 %v218
    %1232 = vmatprep.subr.mxu0 0.0
    %1233 = vmatpush1.msra.mxu0 %v219
    %1234 = vmatprep.subr.mxu0 0.0
    %1235 = vmatpush1.msra.mxu0 %v220
    %1236 = vmatprep.subr.mxu0 0.0
    %1237 = vmatpush1.msra.mxu0 0.0
    %1238 = vmatprep.subr.mxu0 0.0
    %1239 = vmatpush1.msra.mxu0 0.0
    %1240 = vmatprep.subr.mxu0 0.0
    %1241 = vmatpush1.msra.mxu0 0.0
    %1242 = vmatprep.subr.mxu0 0.0
    %1243 = vmatpush1.msra.mxu0 0.0
    %1244 = vmatprep.subr.mxu0 0.0
    %1245 = vmatpush1.msra.mxu0 0.0
    %1246 = vmatprep.subr.mxu0 0.0
    %1247 = vmatpush1.msra.mxu0 0.0
    %1248 = vmatprep.subr.mxu0 0.0
    %1249 = vmatpush1.msra.mxu0 0.0
    %1250 = vmatprep.subr.mxu0 0.0
    %1251 = vmatpush1.msra.mxu0 0.0
    %1252 = vmatprep.subr.mxu0 0.0
    %1253 = vmatpush1.msra.mxu0 0.0
    %1254 = vmatprep.subr.mxu0 0.0
    %1255 = vmatpush1.msra.mxu0 0.0
    %1256 = vmatprep.subr.mxu0 0.0
    %1257 = vmatpush1.msra.mxu0 0.0
    %1258 = vmatprep.subr.mxu0 0.0
    %1259 = vmatpush1.msra.mxu0 0.0
    %1260 = vmatprep.subr.mxu0 0.0
    %1261 = vmatpush1.msra.mxu0 0.0
    %1262 = vmatprep.subr.mxu0 0.0
    %1263 = vmatpush1.msra.mxu0 0.0
    %1264 = vmatprep.subr.mxu0 0.0
    %1265 = vmatpush1.msra.mxu0 0.0
    %1266 = vmatprep.subr.mxu0 0.0
    %1267 = vmatpush1.msra.mxu0 0.0
    %1268 = vmatprep.subr.mxu0 0.0
    %1269 = vmatpush1.msra.mxu0 0.0
    %1270 = vmatprep.subr.mxu0 0.0
    %1271 = vmatpush1.msra.mxu0 0.0
    %1272 = vmatprep.subr.mxu0 0.0
    %1273 = vmatpush1.msra.mxu0 0.0
    %1274 = vmatprep.subr.mxu0 0.0
    %1275 = vmatpush1.msra.mxu0 0.0
    %1276 = vmatprep.subr.mxu0 0.0
    %1277 = vmatpush1.msra.mxu0 0.0
    %1278 = vmatprep.subr.mxu0 0.0
    %1279 = vmatpush1.msra.mxu0 0.0
    %1280 = vmatprep.subr.mxu0 0.0
    %1281 = vmatpush1.msra.mxu0 0.0
    %1282 = vmatprep.subr.mxu0 0.0
    %1283 = vmatpush1.msra.mxu0 0.0
    %1284 = vmatprep.subr.mxu0 0.0
    %1285 = vmatpush1.msra.mxu0 0.0
    %1286 = vmatprep.subr.mxu0 0.0
    %1287 = vmatpush1.msra.mxu0 0.0
    %1288 = vmatprep.subr.mxu0 0.0
    %1289 = vmatpush1.msra.mxu0 0.0
    %1290 = vmatprep.subr.mxu0 0.0
    %1291 = vmatpush1.msra.mxu0 0.0
    %1292 = vmatprep.mubr.f32.mxu0 0.0
    %1293 = vmatmul.mubr.f32.gmra.mrb[0].mxu0 %v1226
    %v1294 = vpop.f32.mrb[0].mxu0
    %v1295 = vadd.f32 0.0, %v1294
    %v1296 = vpop.f32.mrb[0].mxu0
    %1297 = vdwg.mxu0
    %s1298 = scalar_lea.vmem [#allocation2], 32
    %v1299 = vld [vmem:[%s1298] sm:$0xff]
    %v1300 = vadd.f32 %v1299, %v1127
    %v1301 = vmul.f32 %v1300, 0.5
    %v1302 = vtanh.pop %v1301
    %v1303 = vmul.f32 %v1302, 0.5
    %v1304 = vadd.f32 %v1303, 0.5
    %v1305 = vtanh.pop %v1300
    %v1306 = vmul.f32 %v1304, %v1048
    %1308 = vrot.lane.b32.xlu0 %v1305, 64
    %v1309 = vpop.permute.xlu0 %1308
    %v1311 = vmul.f32 %v1304, %v1309
    %1313 = vrot.lane.b32.xlu0 %v1311, 32
    %v1314 = vpop.permute.xlu0 %1313
    %v1316 = vadd.f32 %v1306, %v1314
    %v1317 = vtanh.pop %v1316
    %1319 = vrot.lane.b32.xlu0 %v1317, 64
    %v1320 = vpop.permute.xlu0 %1319
    %v1322 = vmul.f32 %v1304, %v1320
    %1324 = vrot.lane.b32.xlu0 %v1322, 32
    %v1325 = vpop.permute.xlu0 %1324
    %v1326 = vsel %vm252, %v1325, 0
    %1328 = vmatprep.subr.mxu0 0.0
    %1329 = vmatpush1.msra.mxu0 %v213
    %1330 = vmatprep.subr.mxu0 0.0
    %1331 = vmatpush1.msra.mxu0 %v214
    %1332 = vmatprep.subr.mxu0 0.0
    %1333 = vmatpush1.msra.mxu0 %v215
    %1334 = vmatprep.subr.mxu0 0.0
    %1335 = vmatpush1.msra.mxu0 %v216
    %1336 = vmatprep.subr.mxu0 0.0
    %1337 = vmatpush1.msra.mxu0 0.0
    %1338 = vmatprep.subr.mxu0 0.0
    %1339 = vmatpush1.msra.mxu0 0.0
    %1340 = vmatprep.subr.mxu0 0.0
    %1341 = vmatpush1.msra.mxu0 0.0
    %1342 = vmatprep.subr.mxu0 0.0
    %1343 = vmatpush1.msra.mxu0 0.0
    %1344 = vmatprep.subr.mxu0 0.0
    %1345 = vmatpush1.msra.mxu0 0.0
    %1346 = vmatprep.subr.mxu0 0.0
    %1347 = vmatpush1.msra.mxu0 0.0
    %1348 = vmatprep.subr.mxu0 0.0
    %1349 = vmatpush1.msra.mxu0 0.0
    %1350 = vmatprep.subr.mxu0 0.0
    %1351 = vmatpush1.msra.mxu0 0.0
    %1352 = vmatprep.subr.mxu0 0.0
    %1353 = vmatpush1.msra.mxu0 0.0
    %1354 = vmatprep.subr.mxu0 0.0
    %1355 = vmatpush1.msra.mxu0 0.0
    %1356 = vmatprep.subr.mxu0 0.0
    %1357 = vmatpush1.msra.mxu0 0.0
    %1358 = vmatprep.subr.mxu0 0.0
    %1359 = vmatpush1.msra.mxu0 0.0
    %1360 = vmatprep.subr.mxu0 0.0
    %1361 = vmatpush1.msra.mxu0 0.0
    %1362 = vmatprep.subr.mxu0 0.0
    %1363 = vmatpush1.msra.mxu0 0.0
    %1364 = vmatprep.subr.mxu0 0.0
    %1365 = vmatpush1.msra.mxu0 0.0
    %1366 = vmatprep.subr.mxu0 0.0
    %1367 = vmatpush1.msra.mxu0 0.0
    %1368 = vmatprep.subr.mxu0 0.0
    %1369 = vmatpush1.msra.mxu0 0.0
    %1370 = vmatprep.subr.mxu0 0.0
    %1371 = vmatpush1.msra.mxu0 0.0
    %1372 = vmatprep.subr.mxu0 0.0
    %1373 = vmatpush1.msra.mxu0 0.0
    %1374 = vmatprep.subr.mxu0 0.0
    %1375 = vmatpush1.msra.mxu0 0.0
    %1376 = vmatprep.subr.mxu0 0.0
    %1377 = vmatpush1.msra.mxu0 0.0
    %1378 = vmatprep.subr.mxu0 0.0
    %1379 = vmatpush1.msra.mxu0 0.0
    %1380 = vmatprep.subr.mxu0 0.0
    %1381 = vmatpush1.msra.mxu0 0.0
    %1382 = vmatprep.subr.mxu0 0.0
    %1383 = vmatpush1.msra.mxu0 0.0
    %1384 = vmatprep.subr.mxu0 0.0
    %1385 = vmatpush1.msra.mxu0 0.0
    %1386 = vmatprep.subr.mxu0 0.0
    %1387 = vmatpush1.msra.mxu0 0.0
    %1388 = vmatprep.subr.mxu0 0.0
    %1389 = vmatpush1.msra.mxu0 0.0
    %1390 = vmatprep.subr.mxu0 0.0
    %1391 = vmatpush1.msra.mxu0 0.0
    %1392 = vmatprep.mubr.f32.mxu0 0.0
    %1393 = vmatmul.mubr.f32.gmra.mrb[0].mxu0 %v1326
    %v1394 = vpop.f32.mrb[0].mxu0
    %v1395 = vadd.f32 0.0, %v1394
    %v1396 = vpop.f32.mrb[0].mxu0
    %1397 = vdwg.mxu0
    %1398 = vmatprep.subr.mxu0 0.0
    %1399 = vmatpush1.msra.mxu0 %v221
    %1400 = vmatprep.subr.mxu0 0.0
    %1401 = vmatpush1.msra.mxu0 %v222
    %1402 = vmatprep.subr.mxu0 0.0
    %1403 = vmatpush1.msra.mxu0 %v223
    %1404 = vmatprep.subr.mxu0 0.0
    %1405 = vmatpush1.msra.mxu0 %v224
    %1406 = vmatprep.subr.mxu0 0.0
    %1407 = vmatpush1.msra.mxu0 0.0
    %1408 = vmatprep.subr.mxu0 0.0
    %1409 = vmatpush1.msra.mxu0 0.0
    %1410 = vmatprep.subr.mxu0 0.0
    %1411 = vmatpush1.msra.mxu0 0.0
    %1412 = vmatprep.subr.mxu0 0.0
    %1413 = vmatpush1.msra.mxu0 0.0
    %1414 = vmatprep.subr.mxu0 0.0
    %1415 = vmatpush1.msra.mxu0 0.0
    %1416 = vmatprep.subr.mxu0 0.0
    %1417 = vmatpush1.msra.mxu0 0.0
    %1418 = vmatprep.subr.mxu0 0.0
    %1419 = vmatpush1.msra.mxu0 0.0
    %1420 = vmatprep.subr.mxu0 0.0
    %1421 = vmatpush1.msra.mxu0 0.0
    %1422 = vmatprep.subr.mxu0 0.0
    %1423 = vmatpush1.msra.mxu0 0.0
    %1424 = vmatprep.subr.mxu0 0.0
    %1425 = vmatpush1.msra.mxu0 0.0
    %1426 = vmatprep.subr.mxu0 0.0
    %1427 = vmatpush1.msra.mxu0 0.0
    %1428 = vmatprep.subr.mxu0 0.0
    %1429 = vmatpush1.msra.mxu0 0.0
    %1430 = vmatprep.subr.mxu0 0.0
    %1431 = vmatpush1.msra.mxu0 0.0
    %1432 = vmatprep.subr.mxu0 0.0
    %1433 = vmatpush1.msra.mxu0 0.0
    %1434 = vmatprep.subr.mxu0 0.0
    %1435 = vmatpush1.msra.mxu0 0.0
    %1436 = vmatprep.subr.mxu0 0.0
    %1437 = vmatpush1.msra.mxu0 0.0
    %1438 = vmatprep.subr.mxu0 0.0
    %1439 = vmatpush1.msra.mxu0 0.0
    %1440 = vmatprep.subr.mxu0 0.0
    %1441 = vmatpush1.msra.mxu0 0.0
    %1442 = vmatprep.subr.mxu0 0.0
    %1443 = vmatpush1.msra.mxu0 0.0
    %1444 = vmatprep.subr.mxu0 0.0
    %1445 = vmatpush1.msra.mxu0 0.0
    %1446 = vmatprep.subr.mxu0 0.0
    %1447 = vmatpush1.msra.mxu0 0.0
    %1448 = vmatprep.subr.mxu0 0.0
    %1449 = vmatpush1.msra.mxu0 0.0
    %1450 = vmatprep.subr.mxu0 0.0
    %1451 = vmatpush1.msra.mxu0 0.0
    %1452 = vmatprep.subr.mxu0 0.0
    %1453 = vmatpush1.msra.mxu0 0.0
    %1454 = vmatprep.subr.mxu0 0.0
    %1455 = vmatpush1.msra.mxu0 0.0
    %1456 = vmatprep.subr.mxu0 0.0
    %1457 = vmatpush1.msra.mxu0 0.0
    %1458 = vmatprep.subr.mxu0 0.0
    %1459 = vmatpush1.msra.mxu0 0.0
    %1460 = vmatprep.subr.mxu0 0.0
    %1461 = vmatpush1.msra.mxu0 0.0
    %1462 = vmatprep.mubr.f32.mxu0 0.0
    %1463 = vmatmul.mubr.f32.gmra.mrb[0].mxu0 %v1326
    %v1464 = vpop.f32.mrb[0].mxu0
    %v1465 = vadd.f32 %v230, %v1464
    %v1466 = vpop.f32.mrb[0].mxu0
    %1467 = vdwg.mxu0
    %v1468 = vadd.f32 %v1465, %v1295
    %v1469 = vmul.f32 %v1468, 0.5
    %v1470 = vtanh.pop %v1469
    %v1471 = vmul.f32 %v1470, 0.5
    %v1472 = vadd.f32 %v1471, 0.5
    %v1473 = vtanh.pop %v1468
    %v1474 = vmul.f32 %v1472, %v1216
    %1476 = vrot.lane.b32.xlu0 %v1473, 64
    %v1477 = vpop.permute.xlu0 %1476
    %v1479 = vmul.f32 %v1472, %v1477
    %1481 = vrot.lane.b32.xlu0 %v1479, 32
    %v1482 = vpop.permute.xlu0 %1481
    %v1484 = vadd.f32 %v1474, %v1482
    %v1485 = vtanh.pop %v1484
    %1487 = vrot.lane.b32.xlu0 %v1485, 64
    %v1488 = vpop.permute.xlu0 %1487
    %v1490 = vmul.f32 %v1472, %v1488
    %1492 = vrot.lane.b32.xlu0 %v1490, 32
    %v1493 = vpop.permute.xlu0 %1492
    %v1494 = vsel %vm252, %v1493, 0
    %1496 = vmatprep.subr.mxu0 0.0
    %1497 = vmatpush1.msra.mxu0 %v217
    %1498 = vmatprep.subr.mxu0 0.0
    %1499 = vmatpush1.msra.mxu0 %v218
    %1500 = vmatprep.subr.mxu0 0.0
    %1501 = vmatpush1.msra.mxu0 %v219
    %1502 = vmatprep.subr.mxu0 0.0
    %1503 = vmatpush1.msra.mxu0 %v220
    %1504 = vmatprep.subr.mxu0 0.0
    %1505 = vmatpush1.msra.mxu0 0.0
    %1506 = vmatprep.subr.mxu0 0.0
    %1507 = vmatpush1.msra.mxu0 0.0
    %1508 = vmatprep.subr.mxu0 0.0
    %1509 = vmatpush1.msra.mxu0 0.0
    %1510 = vmatprep.subr.mxu0 0.0
    %1511 = vmatpush1.msra.mxu0 0.0
    %1512 = vmatprep.subr.mxu0 0.0
    %1513 = vmatpush1.msra.mxu0 0.0
    %1514 = vmatprep.subr.mxu0 0.0
    %1515 = vmatpush1.msra.mxu0 0.0
    %1516 = vmatprep.subr.mxu0 0.0
    %1517 = vmatpush1.msra.mxu0 0.0
    %1518 = vmatprep.subr.mxu0 0.0
    %1519 = vmatpush1.msra.mxu0 0.0
    %1520 = vmatprep.subr.mxu0 0.0
    %1521 = vmatpush1.msra.mxu0 0.0
    %1522 = vmatprep.subr.mxu0 0.0
    %1523 = vmatpush1.msra.mxu0 0.0
    %1524 = vmatprep.subr.mxu0 0.0
    %1525 = vmatpush1.msra.mxu0 0.0
    %1526 = vmatprep.subr.mxu0 0.0
    %1527 = vmatpush1.msra.mxu0 0.0
    %1528 = vmatprep.subr.mxu0 0.0
    %1529 = vmatpush1.msra.mxu0 0.0
    %1530 = vmatprep.subr.mxu0 0.0
    %1531 = vmatpush1.msra.mxu0 0.0
    %1532 = vmatprep.subr.mxu0 0.0
    %1533 = vmatpush1.msra.mxu0 0.0
    %1534 = vmatprep.subr.mxu0 0.0
    %1535 = vmatpush1.msra.mxu0 0.0
    %1536 = vmatprep.subr.mxu0 0.0
    %1537 = vmatpush1.msra.mxu0 0.0
    %1538 = vmatprep.subr.mxu0 0.0
    %1539 = vmatpush1.msra.mxu0 0.0
    %1540 = vmatprep.subr.mxu0 0.0
    %1541 = vmatpush1.msra.mxu0 0.0
    %1542 = vmatprep.subr.mxu0 0.0
    %1543 = vmatpush1.msra.mxu0 0.0
    %1544 = vmatprep.subr.mxu0 0.0
    %1545 = vmatpush1.msra.mxu0 0.0
    %1546 = vmatprep.subr.mxu0 0.0
    %1547 = vmatpush1.msra.mxu0 0.0
    %1548 = vmatprep.subr.mxu0 0.0
    %1549 = vmatpush1.msra.mxu0 0.0
    %1550 = vmatprep.subr.mxu0 0.0
    %1551 = vmatpush1.msra.mxu0 0.0
    %1552 = vmatprep.subr.mxu0 0.0
    %1553 = vmatpush1.msra.mxu0 0.0
    %1554 = vmatprep.subr.mxu0 0.0
    %1555 = vmatpush1.msra.mxu0 0.0
    %1556 = vmatprep.subr.mxu0 0.0
    %1557 = vmatpush1.msra.mxu0 0.0
    %1558 = vmatprep.subr.mxu0 0.0
    %1559 = vmatpush1.msra.mxu0 0.0
    %1560 = vmatprep.mubr.f32.mxu0 0.0
    %1561 = vmatmul.mubr.f32.gmra.mrb[0].mxu0 %v1494
    %v1562 = vpop.f32.mrb[0].mxu0
    %v1563 = vadd.f32 0.0, %v1562
    %v1564 = vpop.f32.mrb[0].mxu0
    %1565 = vdwg.mxu0
    %s1566 = scalar_lea.vmem [#allocation2], 40
    %v1567 = vld [vmem:[%s1566] sm:$0xff]
    %v1568 = vadd.f32 %v1567, %v1395
    %v1569 = vmul.f32 %v1568, 0.5
    %v1570 = vtanh.pop %v1569
    %v1571 = vmul.f32 %v1570, 0.5
    %v1572 = vadd.f32 %v1571, 0.5
    %v1573 = vtanh.pop %v1568
    %v1574 = vmul.f32 %v1572, %v1316
    %1576 = vrot.lane.b32.xlu0 %v1573, 64
    %v1577 = vpop.permute.xlu0 %1576
    %v1579 = vmul.f32 %v1572, %v1577
    %1581 = vrot.lane.b32.xlu0 %v1579, 32
    %v1582 = vpop.permute.xlu0 %1581
    %v1584 = vadd.f32 %v1574, %v1582
    %v1585 = vtanh.pop %v1584
    %1587 = vrot.lane.b32.xlu0 %v1585, 64
    %v1588 = vpop.permute.xlu0 %1587
    %v1590 = vmul.f32 %v1572, %v1588
    %1592 = vrot.lane.b32.xlu0 %v1590, 32
    %v1593 = vpop.permute.xlu0 %1592
    %v1594 = vsel %vm252, %v1593, 0
    %1596 = vmatprep.subr.mxu0 0.0
    %1597 = vmatpush1.msra.mxu0 %v213
    %1598 = vmatprep.subr.mxu0 0.0
    %1599 = vmatpush1.msra.mxu0 %v214
    %1600 = vmatprep.subr.mxu0 0.0
    %1601 = vmatpush1.msra.mxu0 %v215
    %1602 = vmatprep.subr.mxu0 0.0
    %1603 = vmatpush1.msra.mxu0 %v216
    %1604 = vmatprep.subr.mxu0 0.0
    %1605 = vmatpush1.msra.mxu0 0.0
    %1606 = vmatprep.subr.mxu0 0.0
    %1607 = vmatpush1.msra.mxu0 0.0
    %1608 = vmatprep.subr.mxu0 0.0
    %1609 = vmatpush1.msra.mxu0 0.0
    %1610 = vmatprep.subr.mxu0 0.0
    %1611 = vmatpush1.msra.mxu0 0.0
    %1612 = vmatprep.subr.mxu0 0.0
    %1613 = vmatpush1.msra.mxu0 0.0
    %1614 = vmatprep.subr.mxu0 0.0
    %1615 = vmatpush1.msra.mxu0 0.0
    %1616 = vmatprep.subr.mxu0 0.0
    %1617 = vmatpush1.msra.mxu0 0.0
    %1618 = vmatprep.subr.mxu0 0.0
    %1619 = vmatpush1.msra.mxu0 0.0
    %1620 = vmatprep.subr.mxu0 0.0
    %1621 = vmatpush1.msra.mxu0 0.0
    %1622 = vmatprep.subr.mxu0 0.0
    %1623 = vmatpush1.msra.mxu0 0.0
    %1624 = vmatprep.subr.mxu0 0.0
    %1625 = vmatpush1.msra.mxu0 0.0
    %1626 = vmatprep.subr.mxu0 0.0
    %1627 = vmatpush1.msra.mxu0 0.0
    %1628 = vmatprep.subr.mxu0 0.0
    %1629 = vmatpush1.msra.mxu0 0.0
    %1630 = vmatprep.subr.mxu0 0.0
    %1631 = vmatpush1.msra.mxu0 0.0
    %1632 = vmatprep.subr.mxu0 0.0
    %1633 = vmatpush1.msra.mxu0 0.0
    %1634 = vmatprep.subr.mxu0 0.0
    %1635 = vmatpush1.msra.mxu0 0.0
    %1636 = vmatprep.subr.mxu0 0.0
    %1637 = vmatpush1.msra.mxu0 0.0
    %1638 = vmatprep.subr.mxu0 0.0
    %1639 = vmatpush1.msra.mxu0 0.0
    %1640 = vmatprep.subr.mxu0 0.0
    %1641 = vmatpush1.msra.mxu0 0.0
    %1642 = vmatprep.subr.mxu0 0.0
    %1643 = vmatpush1.msra.mxu0 0.0
    %1644 = vmatprep.subr.mxu0 0.0
    %1645 = vmatpush1.msra.mxu0 0.0
    %1646 = vmatprep.subr.mxu0 0.0
    %1647 = vmatpush1.msra.mxu0 0.0
    %1648 = vmatprep.subr.mxu0 0.0
    %1649 = vmatpush1.msra.mxu0 0.0
    %1650 = vmatprep.subr.mxu0 0.0
    %1651 = vmatpush1.msra.mxu0 0.0
    %1652 = vmatprep.subr.mxu0 0.0
    %1653 = vmatpush1.msra.mxu0 0.0
    %1654 = vmatprep.subr.mxu0 0.0
    %1655 = vmatpush1.msra.mxu0 0.0
    %1656 = vmatprep.subr.mxu0 0.0
    %1657 = vmatpush1.msra.mxu0 0.0
    %1658 = vmatprep.subr.mxu0 0.0
    %1659 = vmatpush1.msra.mxu0 0.0
    %1660 = vmatprep.mubr.f32.mxu0 0.0
    %1661 = vmatmul.mubr.f32.gmra.mrb[0].mxu0 %v1594
    %v1662 = vpop.f32.mrb[0].mxu0
    %v1663 = vadd.f32 0.0, %v1662
    %v1664 = vpop.f32.mrb[0].mxu0
    %1665 = vdwg.mxu0
    %1666 = vmatprep.subr.mxu0 0.0
    %1667 = vmatpush1.msra.mxu0 %v221
    %1668 = vmatprep.subr.mxu0 0.0
    %1669 = vmatpush1.msra.mxu0 %v222
    %1670 = vmatprep.subr.mxu0 0.0
    %1671 = vmatpush1.msra.mxu0 %v223
    %1672 = vmatprep.subr.mxu0 0.0
    %1673 = vmatpush1.msra.mxu0 %v224
    %1674 = vmatprep.subr.mxu0 0.0
    %1675 = vmatpush1.msra.mxu0 0.0
    %1676 = vmatprep.subr.mxu0 0.0
    %1677 = vmatpush1.msra.mxu0 0.0
    %1678 = vmatprep.subr.mxu0 0.0
    %1679 = vmatpush1.msra.mxu0 0.0
    %1680 = vmatprep.subr.mxu0 0.0
    %1681 = vmatpush1.msra.mxu0 0.0
    %1682 = vmatprep.subr.mxu0 0.0
    %1683 = vmatpush1.msra.mxu0 0.0
    %1684 = vmatprep.subr.mxu0 0.0
    %1685 = vmatpush1.msra.mxu0 0.0
    %1686 = vmatprep.subr.mxu0 0.0
    %1687 = vmatpush1.msra.mxu0 0.0
    %1688 = vmatprep.subr.mxu0 0.0
    %1689 = vmatpush1.msra.mxu0 0.0
    %1690 = vmatprep.subr.mxu0 0.0
    %1691 = vmatpush1.msra.mxu0 0.0
    %1692 = vmatprep.subr.mxu0 0.0
    %1693 = vmatpush1.msra.mxu0 0.0
    %1694 = vmatprep.subr.mxu0 0.0
    %1695 = vmatpush1.msra.mxu0 0.0
    %1696 = vmatprep.subr.mxu0 0.0
    %1697 = vmatpush1.msra.mxu0 0.0
    %1698 = vmatprep.subr.mxu0 0.0
    %1699 = vmatpush1.msra.mxu0 0.0
    %1700 = vmatprep.subr.mxu0 0.0
    %1701 = vmatpush1.msra.mxu0 0.0
    %1702 = vmatprep.subr.mxu0 0.0
    %1703 = vmatpush1.msra.mxu0 0.0
    %1704 = vmatprep.subr.mxu0 0.0
    %1705 = vmatpush1.msra.mxu0 0.0
    %1706 = vmatprep.subr.mxu0 0.0
    %1707 = vmatpush1.msra.mxu0 0.0
    %1708 = vmatprep.subr.mxu0 0.0
    %1709 = vmatpush1.msra.mxu0 0.0
    %1710 = vmatprep.subr.mxu0 0.0
    %1711 = vmatpush1.msra.mxu0 0.0
    %1712 = vmatprep.subr.mxu0 0.0
    %1713 = vmatpush1.msra.mxu0 0.0
    %1714 = vmatprep.subr.mxu0 0.0
    %1715 = vmatpush1.msra.mxu0 0.0
    %1716 = vmatprep.subr.mxu0 0.0
    %1717 = vmatpush1.msra.mxu0 0.0
    %1718 = vmatprep.subr.mxu0 0.0
    %1719 = vmatpush1.msra.mxu0 0.0
    %1720 = vmatprep.subr.mxu0 0.0
    %1721 = vmatpush1.msra.mxu0 0.0
    %1722 = vmatprep.subr.mxu0 0.0
    %1723 = vmatpush1.msra.mxu0 0.0
    %1724 = vmatprep.subr.mxu0 0.0
    %1725 = vmatpush1.msra.mxu0 0.0
    %1726 = vmatprep.subr.mxu0 0.0
    %1727 = vmatpush1.msra.mxu0 0.0
    %1728 = vmatprep.subr.mxu0 0.0
    %1729 = vmatpush1.msra.mxu0 0.0
    %1730 = vmatprep.mubr.f32.mxu0 0.0
    %1731 = vmatmul.mubr.f32.gmra.mrb[0].mxu0 %v1594
    %v1732 = vpop.f32.mrb[0].mxu0
    %v1733 = vadd.f32 %v230, %v1732
    %v1734 = vpop.f32.mrb[0].mxu0
    %1735 = vdwg.mxu0
    %v1736 = vadd.f32 %v1733, %v1563
    %v1737 = vmul.f32 %v1736, 0.5
    %v1738 = vtanh.pop %v1737
    %v1739 = vmul.f32 %v1738, 0.5
    %v1740 = vadd.f32 %v1739, 0.5
    %v1741 = vtanh.pop %v1736
    %v1742 = vmul.f32 %v1740, %v1484
    %1744 = vrot.lane.b32.xlu0 %v1741, 64
    %v1745 = vpop.permute.xlu0 %1744
    %v1747 = vmul.f32 %v1740, %v1745
    %1749 = vrot.lane.b32.xlu0 %v1747, 32
    %v1750 = vpop.permute.xlu0 %1749
    %v1752 = vadd.f32 %v1742, %v1750
    %v1753 = vtanh.pop %v1752
    %1755 = vrot.lane.b32.xlu0 %v1753, 64
    %v1756 = vpop.permute.xlu0 %1755
    %v1758 = vmul.f32 %v1740, %v1756
    %1760 = vrot.lane.b32.xlu0 %v1758, 32
    %v1761 = vpop.permute.xlu0 %1760
    %v1762 = vsel %vm252, %v1761, 0
    %1764 = vmatprep.subr.mxu0 0.0
    %1765 = vmatpush1.msra.mxu0 %v217
    %1766 = vmatprep.subr.mxu0 0.0
    %1767 = vmatpush1.msra.mxu0 %v218
    %1768 = vmatprep.subr.mxu0 0.0
    %1769 = vmatpush1.msra.mxu0 %v219
    %1770 = vmatprep.subr.mxu0 0.0
    %1771 = vmatpush1.msra.mxu0 %v220
    %1772 = vmatprep.subr.mxu0 0.0
    %1773 = vmatpush1.msra.mxu0 0.0
    %1774 = vmatprep.subr.mxu0 0.0
    %1775 = vmatpush1.msra.mxu0 0.0
    %1776 = vmatprep.subr.mxu0 0.0
    %1777 = vmatpush1.msra.mxu0 0.0
    %1778 = vmatprep.subr.mxu0 0.0
    %1779 = vmatpush1.msra.mxu0 0.0
    %1780 = vmatprep.subr.mxu0 0.0
    %1781 = vmatpush1.msra.mxu0 0.0
    %1782 = vmatprep.subr.mxu0 0.0
    %1783 = vmatpush1.msra.mxu0 0.0
    %1784 = vmatprep.subr.mxu0 0.0
    %1785 = vmatpush1.msra.mxu0 0.0
    %1786 = vmatprep.subr.mxu0 0.0
    %1787 = vmatpush1.msra.mxu0 0.0
    %1788 = vmatprep.subr.mxu0 0.0
    %1789 = vmatpush1.msra.mxu0 0.0
    %1790 = vmatprep.subr.mxu0 0.0
    %1791 = vmatpush1.msra.mxu0 0.0
    %1792 = vmatprep.subr.mxu0 0.0
    %1793 = vmatpush1.msra.mxu0 0.0
    %1794 = vmatprep.subr.mxu0 0.0
    %1795 = vmatpush1.msra.mxu0 0.0
    %1796 = vmatprep.subr.mxu0 0.0
    %1797 = vmatpush1.msra.mxu0 0.0
    %1798 = vmatprep.subr.mxu0 0.0
    %1799 = vmatpush1.msra.mxu0 0.0
    %1800 = vmatprep.subr.mxu0 0.0
    %1801 = vmatpush1.msra.mxu0 0.0
    %1802 = vmatprep.subr.mxu0 0.0
    %1803 = vmatpush1.msra.mxu0 0.0
    %1804 = vmatprep.subr.mxu0 0.0
    %1805 = vmatpush1.msra.mxu0 0.0
    %1806 = vmatprep.subr.mxu0 0.0
    %1807 = vmatpush1.msra.mxu0 0.0
    %1808 = vmatprep.subr.mxu0 0.0
    %1809 = vmatpush1.msra.mxu0 0.0
    %1810 = vmatprep.subr.mxu0 0.0
    %1811 = vmatpush1.msra.mxu0 0.0
    %1812 = vmatprep.subr.mxu0 0.0
    %1813 = vmatpush1.msra.mxu0 0.0
    %1814 = vmatprep.subr.mxu0 0.0
    %1815 = vmatpush1.msra.mxu0 0.0
    %1816 = vmatprep.subr.mxu0 0.0
    %1817 = vmatpush1.msra.mxu0 0.0
    %1818 = vmatprep.subr.mxu0 0.0
    %1819 = vmatpush1.msra.mxu0 0.0
    %1820 = vmatprep.subr.mxu0 0.0
    %1821 = vmatpush1.msra.mxu0 0.0
    %1822 = vmatprep.subr.mxu0 0.0
    %1823 = vmatpush1.msra.mxu0 0.0
    %1824 = vmatprep.subr.mxu0 0.0
    %1825 = vmatpush1.msra.mxu0 0.0
    %1826 = vmatprep.subr.mxu0 0.0
    %1827 = vmatpush1.msra.mxu0 0.0
    %1828 = vmatprep.mubr.f32.mxu0 0.0
    %1829 = vmatmul.mubr.f32.gmra.mrb[0].mxu0 %v1762
    %v1830 = vpop.f32.mrb[0].mxu0
    %v1831 = vadd.f32 0.0, %v1830
    %v1832 = vpop.f32.mrb[0].mxu0
    %1833 = vdwg.mxu0
    %s1834 = scalar_lea.vmem [#allocation2], 48
    %v1835 = vld [vmem:[%s1834] sm:$0xff]
    %v1836 = vadd.f32 %v1835, %v1663
    %v1837 = vmul.f32 %v1836, 0.5
    %v1838 = vtanh.pop %v1837
    %v1839 = vmul.f32 %v1838, 0.5
    %v1840 = vadd.f32 %v1839, 0.5
    %v1841 = vtanh.pop %v1836
    %v1842 = vmul.f32 %v1840, %v1584
    %1844 = vrot.lane.b32.xlu0 %v1841, 64
    %v1845 = vpop.permute.xlu0 %1844
    %v1847 = vmul.f32 %v1840, %v1845
    %1849 = vrot.lane.b32.xlu0 %v1847, 32
    %v1850 = vpop.permute.xlu0 %1849
    %v1852 = vadd.f32 %v1842, %v1850
    %v1853 = vtanh.pop %v1852
    %1855 = vrot.lane.b32.xlu0 %v1853, 64
    %v1856 = vpop.permute.xlu0 %1855
    %v1858 = vmul.f32 %v1840, %v1856
    %1860 = vrot.lane.b32.xlu0 %v1858, 32
    %v1861 = vpop.permute.xlu0 %1860
    %v1862 = vsel %vm252, %v1861, 0
    %1864 = vmatprep.subr.mxu0 0.0
    %1865 = vmatpush1.msra.mxu0 %v213
    %1866 = vmatprep.subr.mxu0 0.0
    %1867 = vmatpush1.msra.mxu0 %v214
    %1868 = vmatprep.subr.mxu0 0.0
    %1869 = vmatpush1.msra.mxu0 %v215
    %1870 = vmatprep.subr.mxu0 0.0
    %1871 = vmatpush1.msra.mxu0 %v216
    %1872 = vmatprep.subr.mxu0 0.0
    %1873 = vmatpush1.msra.mxu0 0.0
    %1874 = vmatprep.subr.mxu0 0.0
    %1875 = vmatpush1.msra.mxu0 0.0
    %1876 = vmatprep.subr.mxu0 0.0
    %1877 = vmatpush1.msra.mxu0 0.0
    %1878 = vmatprep.subr.mxu0 0.0
    %1879 = vmatpush1.msra.mxu0 0.0
    %1880 = vmatprep.subr.mxu0 0.0
    %1881 = vmatpush1.msra.mxu0 0.0
    %1882 = vmatprep.subr.mxu0 0.0
    %1883 = vmatpush1.msra.mxu0 0.0
    %1884 = vmatprep.subr.mxu0 0.0
    %1885 = vmatpush1.msra.mxu0 0.0
    %1886 = vmatprep.subr.mxu0 0.0
    %1887 = vmatpush1.msra.mxu0 0.0
    %1888 = vmatprep.subr.mxu0 0.0
    %1889 = vmatpush1.msra.mxu0 0.0
    %1890 = vmatprep.subr.mxu0 0.0
    %1891 = vmatpush1.msra.mxu0 0.0
    %1892 = vmatprep.subr.mxu0 0.0
    %1893 = vmatpush1.msra.mxu0 0.0
    %1894 = vmatprep.subr.mxu0 0.0
    %1895 = vmatpush1.msra.mxu0 0.0
    %1896 = vmatprep.subr.mxu0 0.0
    %1897 = vmatpush1.msra.mxu0 0.0
    %1898 = vmatprep.subr.mxu0 0.0
    %1899 = vmatpush1.msra.mxu0 0.0
    %1900 = vmatprep.subr.mxu0 0.0
    %1901 = vmatpush1.msra.mxu0 0.0
    %1902 = vmatprep.subr.mxu0 0.0
    %1903 = vmatpush1.msra.mxu0 0.0
    %1904 = vmatprep.subr.mxu0 0.0
    %1905 = vmatpush1.msra.mxu0 0.0
    %1906 = vmatprep.subr.mxu0 0.0
    %1907 = vmatpush1.msra.mxu0 0.0
    %1908 = vmatprep.subr.mxu0 0.0
    %1909 = vmatpush1.msra.mxu0 0.0
    %1910 = vmatprep.subr.mxu0 0.0
    %1911 = vmatpush1.msra.mxu0 0.0
    %1912 = vmatprep.subr.mxu0 0.0
    %1913 = vmatpush1.msra.mxu0 0.0
    %1914 = vmatprep.subr.mxu0 0.0
    %1915 = vmatpush1.msra.mxu0 0.0
    %1916 = vmatprep.subr.mxu0 0.0
    %1917 = vmatpush1.msra.mxu0 0.0
    %1918 = vmatprep.subr.mxu0 0.0
    %1919 = vmatpush1.msra.mxu0 0.0
    %1920 = vmatprep.subr.mxu0 0.0
    %1921 = vmatpush1.msra.mxu0 0.0
    %1922 = vmatprep.subr.mxu0 0.0
    %1923 = vmatpush1.msra.mxu0 0.0
    %1924 = vmatprep.subr.mxu0 0.0
    %1925 = vmatpush1.msra.mxu0 0.0
    %1926 = vmatprep.subr.mxu0 0.0
    %1927 = vmatpush1.msra.mxu0 0.0
    %1928 = vmatprep.mubr.f32.mxu0 0.0
    %1929 = vmatmul.mubr.f32.gmra.mrb[0].mxu0 %v1862
    %v1930 = vpop.f32.mrb[0].mxu0
    %v1931 = vadd.f32 0.0, %v1930
    %v1932 = vpop.f32.mrb[0].mxu0
    %1933 = vdwg.mxu0
    %1934 = vmatprep.subr.mxu0 0.0
    %1935 = vmatpush1.msra.mxu0 %v221
    %1936 = vmatprep.subr.mxu0 0.0
    %1937 = vmatpush1.msra.mxu0 %v222
    %1938 = vmatprep.subr.mxu0 0.0
    %1939 = vmatpush1.msra.mxu0 %v223
    %1940 = vmatprep.subr.mxu0 0.0
    %1941 = vmatpush1.msra.mxu0 %v224
    %1942 = vmatprep.subr.mxu0 0.0
    %1943 = vmatpush1.msra.mxu0 0.0
    %1944 = vmatprep.subr.mxu0 0.0
    %1945 = vmatpush1.msra.mxu0 0.0
    %1946 = vmatprep.subr.mxu0 0.0
    %1947 = vmatpush1.msra.mxu0 0.0
    %1948 = vmatprep.subr.mxu0 0.0
    %1949 = vmatpush1.msra.mxu0 0.0
    %1950 = vmatprep.subr.mxu0 0.0
    %1951 = vmatpush1.msra.mxu0 0.0
    %1952 = vmatprep.subr.mxu0 0.0
    %1953 = vmatpush1.msra.mxu0 0.0
    %1954 = vmatprep.subr.mxu0 0.0
    %1955 = vmatpush1.msra.mxu0 0.0
    %1956 = vmatprep.subr.mxu0 0.0
    %1957 = vmatpush1.msra.mxu0 0.0
    %1958 = vmatprep.subr.mxu0 0.0
    %1959 = vmatpush1.msra.mxu0 0.0
    %1960 = vmatprep.subr.mxu0 0.0
    %1961 = vmatpush1.msra.mxu0 0.0
    %1962 = vmatprep.subr.mxu0 0.0
    %1963 = vmatpush1.msra.mxu0 0.0
    %1964 = vmatprep.subr.mxu0 0.0
    %1965 = vmatpush1.msra.mxu0 0.0
    %1966 = vmatprep.subr.mxu0 0.0
    %1967 = vmatpush1.msra.mxu0 0.0
    %1968 = vmatprep.subr.mxu0 0.0
    %1969 = vmatpush1.msra.mxu0 0.0
    %1970 = vmatprep.subr.mxu0 0.0
    %1971 = vmatpush1.msra.mxu0 0.0
    %1972 = vmatprep.subr.mxu0 0.0
    %1973 = vmatpush1.msra.mxu0 0.0
    %1974 = vmatprep.subr.mxu0 0.0
    %1975 = vmatpush1.msra.mxu0 0.0
    %1976 = vmatprep.subr.mxu0 0.0
    %1977 = vmatpush1.msra.mxu0 0.0
    %1978 = vmatprep.subr.mxu0 0.0
    %1979 = vmatpush1.msra.mxu0 0.0
    %1980 = vmatprep.subr.mxu0 0.0
    %1981 = vmatpush1.msra.mxu0 0.0
    %1982 = vmatprep.subr.mxu0 0.0
    %1983 = vmatpush1.msra.mxu0 0.0
    %1984 = vmatprep.subr.mxu0 0.0
    %1985 = vmatpush1.msra.mxu0 0.0
    %1986 = vmatprep.subr.mxu0 0.0
    %1987 = vmatpush1.msra.mxu0 0.0
    %1988 = vmatprep.subr.mxu0 0.0
    %1989 = vmatpush1.msra.mxu0 0.0
    %1990 = vmatprep.subr.mxu0 0.0
    %1991 = vmatpush1.msra.mxu0 0.0
    %1992 = vmatprep.subr.mxu0 0.0
    %1993 = vmatpush1.msra.mxu0 0.0
    %1994 = vmatprep.subr.mxu0 0.0
    %1995 = vmatpush1.msra.mxu0 0.0
    %1996 = vmatprep.subr.mxu0 0.0
    %1997 = vmatpush1.msra.mxu0 0.0
    %1998 = vmatprep.mubr.f32.mxu0 0.0
    %1999 = vmatmul.mubr.f32.gmra.mrb[0].mxu0 %v1862
    %v2000 = vpop.f32.mrb[0].mxu0
    %v2001 = vadd.f32 %v230, %v2000
    %v2002 = vpop.f32.mrb[0].mxu0
    %2003 = vdwg.mxu0
    %v2004 = vadd.f32 %v2001, %v1831
    %v2005 = vmul.f32 %v2004, 0.5
    %v2006 = vtanh.pop %v2005
    %v2007 = vmul.f32 %v2006, 0.5
    %v2008 = vadd.f32 %v2007, 0.5
    %v2009 = vtanh.pop %v2004
    %v2010 = vmul.f32 %v2008, %v1752
    %2012 = vrot.lane.b32.xlu0 %v2009, 64
    %v2013 = vpop.permute.xlu0 %2012
    %v2015 = vmul.f32 %v2008, %v2013
    %2017 = vrot.lane.b32.xlu0 %v2015, 32
    %v2018 = vpop.permute.xlu0 %2017
    %v2020 = vadd.f32 %v2010, %v2018
    %v2021 = vtanh.pop %v2020
    %2023 = vrot.lane.b32.xlu0 %v2021, 64
    %v2024 = vpop.permute.xlu0 %2023
    %v2026 = vmul.f32 %v2008, %v2024
    %2028 = vrot.lane.b32.xlu0 %v2026, 32
    %v2029 = vpop.permute.xlu0 %2028
    %v2030 = vsel %vm252, %v2029, 0
    %2032 = vmatprep.subr.mxu0 0.0
    %2033 = vmatpush1.msra.mxu0 %v217
    %2034 = vmatprep.subr.mxu0 0.0
    %2035 = vmatpush1.msra.mxu0 %v218
    %2036 = vmatprep.subr.mxu0 0.0
    %2037 = vmatpush1.msra.mxu0 %v219
    %2038 = vmatprep.subr.mxu0 0.0
    %2039 = vmatpush1.msra.mxu0 %v220
    %2040 = vmatprep.subr.mxu0 0.0
    %2041 = vmatpush1.msra.mxu0 0.0
    %2042 = vmatprep.subr.mxu0 0.0
    %2043 = vmatpush1.msra.mxu0 0.0
    %2044 = vmatprep.subr.mxu0 0.0
    %2045 = vmatpush1.msra.mxu0 0.0
    %2046 = vmatprep.subr.mxu0 0.0
    %2047 = vmatpush1.msra.mxu0 0.0
    %2048 = vmatprep.subr.mxu0 0.0
    %2049 = vmatpush1.msra.mxu0 0.0
    %2050 = vmatprep.subr.mxu0 0.0
    %2051 = vmatpush1.msra.mxu0 0.0
    %2052 = vmatprep.subr.mxu0 0.0
    %2053 = vmatpush1.msra.mxu0 0.0
    %2054 = vmatprep.subr.mxu0 0.0
    %2055 = vmatpush1.msra.mxu0 0.0
    %2056 = vmatprep.subr.mxu0 0.0
    %2057 = vmatpush1.msra.mxu0 0.0
    %2058 = vmatprep.subr.mxu0 0.0
    %2059 = vmatpush1.msra.mxu0 0.0
    %2060 = vmatprep.subr.mxu0 0.0
    %2061 = vmatpush1.msra.mxu0 0.0
    %2062 = vmatprep.subr.mxu0 0.0
    %2063 = vmatpush1.msra.mxu0 0.0
    %2064 = vmatprep.subr.mxu0 0.0
    %2065 = vmatpush1.msra.mxu0 0.0
    %2066 = vmatprep.subr.mxu0 0.0
    %2067 = vmatpush1.msra.mxu0 0.0
    %2068 = vmatprep.subr.mxu0 0.0
    %2069 = vmatpush1.msra.mxu0 0.0
    %2070 = vmatprep.subr.mxu0 0.0
    %2071 = vmatpush1.msra.mxu0 0.0
    %2072 = vmatprep.subr.mxu0 0.0
    %2073 = vmatpush1.msra.mxu0 0.0
    %2074 = vmatprep.subr.mxu0 0.0
    %2075 = vmatpush1.msra.mxu0 0.0
    %2076 = vmatprep.subr.mxu0 0.0
    %2077 = vmatpush1.msra.mxu0 0.0
    %2078 = vmatprep.subr.mxu0 0.0
    %2079 = vmatpush1.msra.mxu0 0.0
    %2080 = vmatprep.subr.mxu0 0.0
    %2081 = vmatpush1.msra.mxu0 0.0
    %2082 = vmatprep.subr.mxu0 0.0
    %2083 = vmatpush1.msra.mxu0 0.0
    %2084 = vmatprep.subr.mxu0 0.0
    %2085 = vmatpush1.msra.mxu0 0.0
    %2086 = vmatprep.subr.mxu0 0.0
    %2087 = vmatpush1.msra.mxu0 0.0
    %2088 = vmatprep.subr.mxu0 0.0
    %2089 = vmatpush1.msra.mxu0 0.0
    %2090 = vmatprep.subr.mxu0 0.0
    %2091 = vmatpush1.msra.mxu0 0.0
    %2092 = vmatprep.subr.mxu0 0.0
    %2093 = vmatpush1.msra.mxu0 0.0
    %2094 = vmatprep.subr.mxu0 0.0
    %2095 = vmatpush1.msra.mxu0 0.0
    %2096 = vmatprep.mubr.f32.mxu0 0.0
    %2097 = vmatmul.mubr.f32.gmra.mrb[0].mxu0 %v2030
    %v2098 = vpop.f32.mrb[0].mxu0
    %v2099 = vadd.f32 0.0, %v2098
    %v2100 = vpop.f32.mrb[0].mxu0
    %2101 = vdwg.mxu0
    %v2102 = vld [vmem:[#allocation2 + $0x38] sm:$0xff]
    %v2103 = vadd.f32 %v2102, %v1931
    %v2104 = vmul.f32 %v2103, 0.5
    %v2105 = vtanh.pop %v2104
    %v2106 = vmul.f32 %v2105, 0.5
    %v2107 = vadd.f32 %v2106, 0.5
    %v2108 = vtanh.pop %v2103
    %v2109 = vmul.f32 %v2107, %v1852
    %2111 = vrot.lane.b32.xlu0 %v2108, 64
    %v2112 = vpop.permute.xlu0 %2111
    %v2114 = vmul.f32 %v2107, %v2112
    %2116 = vrot.lane.b32.xlu0 %v2114, 32
    %v2117 = vpop.permute.xlu0 %2116
    %v2119 = vadd.f32 %v2109, %v2117
    %v2120 = vtanh.pop %v2119
    %2122 = vrot.lane.b32.xlu0 %v2120, 64
    %v2123 = vpop.permute.xlu0 %2122
    %v2125 = vmul.f32 %v2107, %v2123
    %2127 = vrot.lane.b32.xlu0 %v2125, 32
    %v2128 = vpop.permute.xlu0 %2127
    %v2129 = vsel %vm252, %v2128, 0
    %2131 = vmatprep.subr.mxu0 0.0
    %2132 = vmatpush1.msra.mxu0 %v221
    %2133 = vmatprep.subr.mxu0 0.0
    %2134 = vmatpush1.msra.mxu0 %v222
    %2135 = vmatprep.subr.mxu0 0.0
    %2136 = vmatpush1.msra.mxu0 %v223
    %2137 = vmatprep.subr.mxu0 0.0
    %2138 = vmatpush1.msra.mxu0 %v224
    %2139 = vmatprep.subr.mxu0 0.0
    %2140 = vmatpush1.msra.mxu0 0.0
    %2141 = vmatprep.subr.mxu0 0.0
    %2142 = vmatpush1.msra.mxu0 0.0
    %2143 = vmatprep.subr.mxu0 0.0
    %2144 = vmatpush1.msra.mxu0 0.0
    %2145 = vmatprep.subr.mxu0 0.0
    %2146 = vmatpush1.msra.mxu0 0.0
    %2147 = vmatprep.subr.mxu0 0.0
    %2148 = vmatpush1.msra.mxu0 0.0
    %2149 = vmatprep.subr.mxu0 0.0
    %2150 = vmatpush1.msra.mxu0 0.0
    %2151 = vmatprep.subr.mxu0 0.0
    %2152 = vmatpush1.msra.mxu0 0.0
    %2153 = vmatprep.subr.mxu0 0.0
    %2154 = vmatpush1.msra.mxu0 0.0
    %2155 = vmatprep.subr.mxu0 0.0
    %2156 = vmatpush1.msra.mxu0 0.0
    %2157 = vmatprep.subr.mxu0 0.0
    %2158 = vmatpush1.msra.mxu0 0.0
    %2159 = vmatprep.subr.mxu0 0.0
    %2160 = vmatpush1.msra.mxu0 0.0
    %2161 = vmatprep.subr.mxu0 0.0
    %2162 = vmatpush1.msra.mxu0 0.0
    %2163 = vmatprep.subr.mxu0 0.0
    %2164 = vmatpush1.msra.mxu0 0.0
    %2165 = vmatprep.subr.mxu0 0.0
    %2166 = vmatpush1.msra.mxu0 0.0
    %2167 = vmatprep.subr.mxu0 0.0
    %2168 = vmatpush1.msra.mxu0 0.0
    %2169 = vmatprep.subr.mxu0 0.0
    %2170 = vmatpush1.msra.mxu0 0.0
    %2171 = vmatprep.subr.mxu0 0.0
    %2172 = vmatpush1.msra.mxu0 0.0
    %2173 = vmatprep.subr.mxu0 0.0
    %2174 = vmatpush1.msra.mxu0 0.0
    %2175 = vmatprep.subr.mxu0 0.0
    %2176 = vmatpush1.msra.mxu0 0.0
    %2177 = vmatprep.subr.mxu0 0.0
    %2178 = vmatpush1.msra.mxu0 0.0
    %2179 = vmatprep.subr.mxu0 0.0
    %2180 = vmatpush1.msra.mxu0 0.0
    %2181 = vmatprep.subr.mxu0 0.0
    %2182 = vmatpush1.msra.mxu0 0.0
    %2183 = vmatprep.subr.mxu0 0.0
    %2184 = vmatpush1.msra.mxu0 0.0
    %2185 = vmatprep.subr.mxu0 0.0
    %2186 = vmatpush1.msra.mxu0 0.0
    %2187 = vmatprep.subr.mxu0 0.0
    %2188 = vmatpush1.msra.mxu0 0.0
    %2189 = vmatprep.subr.mxu0 0.0
    %2190 = vmatpush1.msra.mxu0 0.0
    %2191 = vmatprep.subr.mxu0 0.0
    %2192 = vmatpush1.msra.mxu0 0.0
    %2193 = vmatprep.subr.mxu0 0.0
    %2194 = vmatpush1.msra.mxu0 0.0
    %2195 = vmatprep.mubr.f32.mxu0 0.0
    %2196 = vmatmul.mubr.f32.gmra.mrb[0].mxu0 %v2129
    %v2197 = vpop.f32.mrb[0].mxu0
    %v2198 = vadd.f32 %v230, %v2197
    %v2199 = vpop.f32.mrb[0].mxu0
    %2200 = vdwg.mxu0
    %v2201 = vadd.f32 %v2198, %v2099
    %v2202 = vmul.f32 %v2201, 0.5
    %v2203 = vtanh.pop %v2202
    %v2204 = vmul.f32 %v2203, 0.5
    %v2205 = vadd.f32 %v2204, 0.5
    %v2206 = vtanh.pop %v2201
    %v2207 = vmul.f32 %v2205, %v2020
    %2209 = vrot.lane.b32.xlu0 %v2206, 64
    %v2210 = vpop.permute.xlu0 %2209
    %v2212 = vmul.f32 %v2205, %v2210
    %2214 = vrot.lane.b32.xlu0 %v2212, 32
    %v2215 = vpop.permute.xlu0 %2214
    %v2217 = vadd.f32 %v2207, %v2215
    %v2218 = vtanh.pop %v2217
    %2220 = vrot.lane.b32.xlu0 %v2218, 64
    %v2221 = vpop.permute.xlu0 %2220
    %v2223 = vmul.f32 %v2205, %v2221
    %v2224 = vld [vmem:[%s7] sm:$0xff]
    %v2225 = vld [vmem:[%s7 + $0x8] sm:$0xff]
    %v2226 = vld [vmem:[%s7 + $0x10] sm:$0xff]
    %v2227 = vld [vmem:[%s7 + $0x18] sm:$0xff]
    %v2228 = vld [vmem:[%s8] sm:$0x1]
    %v2230 = vlaneseq
    %v2231 = vshrl.u32 %v2230, 7
    %v2232 = vsub.s32 0, %v2231
    %v2233 = vrot.slane %v2228, %v2232
    %2236 = vrot.lane.b32.xlu0 %v2223, 32
    %v2237 = vpop.permute.xlu0 %2236
    %v2238 = vsel %vm252, %v2237, 0
    %2240 = vmatprep.subr.mxu0 0.0
    %2241 = vmatpush1.msra.mxu0 %v2224
    %2242 = vmatprep.subr.mxu0 0.0
    %2243 = vmatpush1.msra.mxu0 %v2225
    %2244 = vmatprep.subr.mxu0 0.0
    %2245 = vmatpush1.msra.mxu0 %v2226
    %2246 = vmatprep.subr.mxu0 0.0
    %2247 = vmatpush1.msra.mxu0 %v2227
    %2248 = vmatprep.subr.mxu0 0.0
    %2249 = vmatpush1.msra.mxu0 0.0
    %2250 = vmatprep.subr.mxu0 0.0
    %2251 = vmatpush1.msra.mxu0 0.0
    %2252 = vmatprep.subr.mxu0 0.0
    %2253 = vmatpush1.msra.mxu0 0.0
    %2254 = vmatprep.subr.mxu0 0.0
    %2255 = vmatpush1.msra.mxu0 0.0
    %2256 = vmatprep.subr.mxu0 0.0
    %2257 = vmatpush1.msra.mxu0 0.0
    %2258 = vmatprep.subr.mxu0 0.0
    %2259 = vmatpush1.msra.mxu0 0.0
    %2260 = vmatprep.subr.mxu0 0.0
    %2261 = vmatpush1.msra.mxu0 0.0
    %2262 = vmatprep.subr.mxu0 0.0
    %2263 = vmatpush1.msra.mxu0 0.0
    %2264 = vmatprep.subr.mxu0 0.0
    %2265 = vmatpush1.msra.mxu0 0.0
    %2266 = vmatprep.subr.mxu0 0.0
    %2267 = vmatpush1.msra.mxu0 0.0
    %2268 = vmatprep.subr.mxu0 0.0
    %2269 = vmatpush1.msra.mxu0 0.0
    %2270 = vmatprep.subr.mxu0 0.0
    %2271 = vmatpush1.msra.mxu0 0.0
    %2272 = vmatprep.subr.mxu0 0.0
    %2273 = vmatpush1.msra.mxu0 0.0
    %2274 = vmatprep.subr.mxu0 0.0
    %2275 = vmatpush1.msra.mxu0 0.0
    %2276 = vmatprep.subr.mxu0 0.0
    %2277 = vmatpush1.msra.mxu0 0.0
    %2278 = vmatprep.subr.mxu0 0.0
    %2279 = vmatpush1.msra.mxu0 0.0
    %2280 = vmatprep.subr.mxu0 0.0
    %2281 = vmatpush1.msra.mxu0 0.0
    %2282 = vmatprep.subr.mxu0 0.0
    %2283 = vmatpush1.msra.mxu0 0.0
    %2284 = vmatprep.subr.mxu0 0.0
    %2285 = vmatpush1.msra.mxu0 0.0
    %2286 = vmatprep.subr.mxu0 0.0
    %2287 = vmatpush1.msra.mxu0 0.0
    %2288 = vmatprep.subr.mxu0 0.0
    %2289 = vmatpush1.msra.mxu0 0.0
    %2290 = vmatprep.subr.mxu0 0.0
    %2291 = vmatpush1.msra.mxu0 0.0
    %2292 = vmatprep.subr.mxu0 0.0
    %2293 = vmatpush1.msra.mxu0 0.0
    %2294 = vmatprep.subr.mxu0 0.0
    %2295 = vmatpush1.msra.mxu0 0.0
    %2296 = vmatprep.subr.mxu0 0.0
    %2297 = vmatpush1.msra.mxu0 0.0
    %2298 = vmatprep.subr.mxu0 0.0
    %2299 = vmatpush1.msra.mxu0 0.0
    %2300 = vmatprep.subr.mxu0 0.0
    %2301 = vmatpush1.msra.mxu0 0.0
    %2302 = vmatprep.subr.mxu0 0.0
    %2303 = vmatpush1.msra.mxu0 0.0
    %2304 = vmatprep.mubr.f32.mxu0 0.0
    %2305 = vmatmul.mubr.f32.gmra.mrb[0].mxu0 %v2238
    %v2306 = vpop.f32.mrb[0].mxu0
    %v2307 = vadd.f32 %v2233, %v2306
    %v2308 = vpop.f32.mrb[0].mxu0
    %2309 = vdwg.mxu0
    %v2310 = vmax.f32 %v2307, 0.0
    %v2311 = vld [vmem:[%s9] sm:$0xff]
    %v2312 = vld [vmem:[%s9 + $0x8] sm:$0xff]
    %v2313 = vld [vmem:[%s9 + $0x10] sm:$0xff]
    %v2314 = vld [vmem:[%s9 + $0x18] sm:$0xff]
    %v2315 = vld [vmem:[%s10] sm:$0x1]
    %v2317 = vlaneseq
    %v2318 = vshrl.u32 %v2317, 7
    %v2319 = vsub.s32 0, %v2318
    %v2320 = vrot.slane %v2315, %v2319
    %v2323 = vsel %vm252, %v2310, 0
    %2325 = vmatprep.subr.mxu0 0.0
    %2326 = vmatpush1.msra.mxu0 %v2311
    %2327 = vmatprep.subr.mxu0 0.0
    %2328 = vmatpush1.msra.mxu0 %v2312
    %2329 = vmatprep.subr.mxu0 0.0
    %2330 = vmatpush1.msra.mxu0 %v2313
    %2331 = vmatprep.subr.mxu0 0.0
    %2332 = vmatpush1.msra.mxu0 %v2314
    %2333 = vmatprep.subr.mxu0 0.0
    %2334 = vmatpush1.msra.mxu0 0.0
    %2335 = vmatprep.subr.mxu0 0.0
    %2336 = vmatpush1.msra.mxu0 0.0
    %2337 = vmatprep.subr.mxu0 0.0
    %2338 = vmatpush1.msra.mxu0 0.0
    %2339 = vmatprep.subr.mxu0 0.0
    %2340 = vmatpush1.msra.mxu0 0.0
    %2341 = vmatprep.subr.mxu0 0.0
    %2342 = vmatpush1.msra.mxu0 0.0
    %2343 = vmatprep.subr.mxu0 0.0
    %2344 = vmatpush1.msra.mxu0 0.0
    %2345 = vmatprep.subr.mxu0 0.0
    %2346 = vmatpush1.msra.mxu0 0.0
    %2347 = vmatprep.subr.mxu0 0.0
    %2348 = vmatpush1.msra.mxu0 0.0
    %2349 = vmatprep.subr.mxu0 0.0
    %2350 = vmatpush1.msra.mxu0 0.0
    %2351 = vmatprep.subr.mxu0 0.0
    %2352 = vmatpush1.msra.mxu0 0.0
    %2353 = vmatprep.subr.mxu0 0.0
    %2354 = vmatpush1.msra.mxu0 0.0
    %2355 = vmatprep.subr.mxu0 0.0
    %2356 = vmatpush1.msra.mxu0 0.0
    %2357 = vmatprep.subr.mxu0 0.0
    %2358 = vmatpush1.msra.mxu0 0.0
    %2359 = vmatprep.subr.mxu0 0.0
    %2360 = vmatpush1.msra.mxu0 0.0
    %2361 = vmatprep.subr.mxu0 0.0
    %2362 = vmatpush1.msra.mxu0 0.0
    %2363 = vmatprep.subr.mxu0 0.0
    %2364 = vmatpush1.msra.mxu0 0.0
    %2365 = vmatprep.subr.mxu0 0.0
    %2366 = vmatpush1.msra.mxu0 0.0
    %2367 = vmatprep.subr.mxu0 0.0
    %2368 = vmatpush1.msra.mxu0 0.0
    %2369 = vmatprep.subr.mxu0 0.0
    %2370 = vmatpush1.msra.mxu0 0.0
    %2371 = vmatprep.subr.mxu0 0.0
    %2372 = vmatpush1.msra.mxu0 0.0
    %2373 = vmatprep.subr.mxu0 0.0
    %2374 = vmatpush1.msra.mxu0 0.0
    %2375 = vmatprep.subr.mxu0 0.0
    %2376 = vmatpush1.msra.mxu0 0.0
    %2377 = vmatprep.subr.mxu0 0.0
    %2378 = vmatpush1.msra.mxu0 0.0
    %2379 = vmatprep.subr.mxu0 0.0
    %2380 = vmatpush1.msra.mxu0 0.0
    %2381 = vmatprep.subr.mxu0 0.0
    %2382 = vmatpush1.msra.mxu0 0.0
    %2383 = vmatprep.subr.mxu0 0.0
    %2384 = vmatpush1.msra.mxu0 0.0
    %2385 = vmatprep.subr.mxu0 0.0
    %2386 = vmatpush1.msra.mxu0 0.0
    %2387 = vmatprep.subr.mxu0 0.0
    %2388 = vmatpush1.msra.mxu0 0.0
    %2389 = vmatprep.mubr.f32.mxu0 0.0
    %2390 = vmatmul.mubr.f32.gmra.mrb[0].mxu0 %v2323
    %v2391 = vpop.f32.mrb[0].mxu0
    %v2392 = vadd.f32 %v2320, %v2391
    %v2393 = vpop.f32.mrb[0].mxu0
    %2394 = vdwg.mxu0
    %v2395 = vmax.f32 %v2392, 0.0
    %v2396 = vld [vmem:[%s11] sm:$0xff]
    %v2397 = vld [vmem:[%s11 + $0x8] sm:$0xff]
    %v2398 = vld [vmem:[%s12] sm:$0x1]
    %v2400 = vlaneseq
    %v2401 = vshrl.u32 %v2400, 7
    %v2402 = vsub.s32 0, %v2401
    %v2403 = vrot.slane %v2398, %v2402
    %v2406 = vsel %vm75, %v2395, 0
    %2408 = vmatprep.subr.mxu0 0.0
    %2409 = vmatpush1.msra.mxu0 %v2396
    %2410 = vmatprep.subr.mxu0 0.0
    %2411 = vmatpush1.msra.mxu0 %v2397
    %2412 = vmatprep.subr.mxu0 0.0
    %2413 = vmatpush1.msra.mxu0 0.0
    %2414 = vmatprep.subr.mxu0 0.0
    %2415 = vmatpush1.msra.mxu0 0.0
    %2416 = vmatprep.subr.mxu0 0.0
    %2417 = vmatpush1.msra.mxu0 0.0
    %2418 = vmatprep.subr.mxu0 0.0
    %2419 = vmatpush1.msra.mxu0 0.0
    %2420 = vmatprep.subr.mxu0 0.0
    %2421 = vmatpush1.msra.mxu0 0.0
    %2422 = vmatprep.subr.mxu0 0.0
    %2423 = vmatpush1.msra.mxu0 0.0
    %2424 = vmatprep.subr.mxu0 0.0
    %2425 = vmatpush1.msra.mxu0 0.0
    %2426 = vmatprep.subr.mxu0 0.0
    %2427 = vmatpush1.msra.mxu0 0.0
    %2428 = vmatprep.subr.mxu0 0.0
    %2429 = vmatpush1.msra.mxu0 0.0
    %2430 = vmatprep.subr.mxu0 0.0
    %2431 = vmatpush1.msra.mxu0 0.0
    %2432 = vmatprep.subr.mxu0 0.0
    %2433 = vmatpush1.msra.mxu0 0.0
    %2434 = vmatprep.subr.mxu0 0.0
    %2435 = vmatpush1.msra.mxu0 0.0
    %2436 = vmatprep.subr.mxu0 0.0
    %2437 = vmatpush1.msra.mxu0 0.0
    %2438 = vmatprep.subr.mxu0 0.0
    %2439 = vmatpush1.msra.mxu0 0.0
    %2440 = vmatprep.subr.mxu0 0.0
    %2441 = vmatpush1.msra.mxu0 0.0
    %2442 = vmatprep.subr.mxu0 0.0
    %2443 = vmatpush1.msra.mxu0 0.0
    %2444 = vmatprep.subr.mxu0 0.0
    %2445 = vmatpush1.msra.mxu0 0.0
    %2446 = vmatprep.subr.mxu0 0.0
    %2447 = vmatpush1.msra.mxu0 0.0
    %2448 = vmatprep.subr.mxu0 0.0
    %2449 = vmatpush1.msra.mxu0 0.0
    %2450 = vmatprep.subr.mxu0 0.0
    %2451 = vmatpush1.msra.mxu0 0.0
    %2452 = vmatprep.subr.mxu0 0.0
    %2453 = vmatpush1.msra.mxu0 0.0
    %2454 = vmatprep.subr.mxu0 0.0
    %2455 = vmatpush1.msra.mxu0 0.0
    %2456 = vmatprep.subr.mxu0 0.0
    %2457 = vmatpush1.msra.mxu0 0.0
    %2458 = vmatprep.subr.mxu0 0.0
    %2459 = vmatpush1.msra.mxu0 0.0
    %2460 = vmatprep.subr.mxu0 0.0
    %2461 = vmatpush1.msra.mxu0 0.0
    %2462 = vmatprep.subr.mxu0 0.0
    %2463 = vmatpush1.msra.mxu0 0.0
    %2464 = vmatprep.subr.mxu0 0.0
    %2465 = vmatpush1.msra.mxu0 0.0
    %2466 = vmatprep.subr.mxu0 0.0
    %2467 = vmatpush1.msra.mxu0 0.0
    %2468 = vmatprep.subr.mxu0 0.0
    %2469 = vmatpush1.msra.mxu0 0.0
    %2470 = vmatprep.subr.mxu0 0.0
    %2471 = vmatpush1.msra.mxu0 0.0
    %2472 = vmatprep.mubr.f32.mxu0 0.0
    %2473 = vmatmul.mubr.f32.gmra.mrb[0].mxu0 %v2406
    %v2474 = vpop.f32.mrb[0].mxu0
    %v2475 = vadd.f32 %v2403, %v2474
    %v2476 = vpop.f32.mrb[0].mxu0
    %2477 = vdwg.mxu0
    %vm2478 = vcmask 31744
    %2479 = vst.msk [vmem:[%s13] sm:$0xff] %vm2478, %v2475
    // Predicated region
    $region58: #{tpu_custom_call.1} parent=1 // pred_check
      _
    $region59: #{tpu_custom_call.1} parent=1 // pred_check_branch
      %2481 = sbr.rel (0) target = $region61
    $region60: #{tpu_custom_call.1} parent=1 // pred_region
      _
    $region61: #{tpu_custom_call.1} parent=1 // pred_fallthru
      _
    // Predicated region
    $region62: #{tpu_custom_call.1} parent=1 // pred_check
      _
    $region63: #{tpu_custom_call.1} parent=1 // pred_check_branch
      %2483 = sbr.rel (0) target = $region65
    $region64: #{tpu_custom_call.1} parent=1 // pred_region
      _
    $region65: #{tpu_custom_call.1} parent=1 // pred_fallthru
      _
    %2484 = vsyncpa [#allocation4], 1

</llo_original>
